<compile_context>
chip_gen: v7x
topology: tpu7x:2x2x1
jax: 0.10.0
libtpu: 0.0.40
codegen_flags: <defaults>
</compile_context>

<pallas_src>
import functools

import jax
import jax.numpy as jnp
from jax.experimental import pallas as pl
from jax.experimental.pallas import tpu as pltpu


ACT_PAD = 64      # per-branch padded logits width (two branches -> 128 lanes)
OUT_LANES = 128   # lane-dense [a_ctrl, a_com, lp_ctrl, lp_com, 0...] output


# ----------------------------- Pallas kernel --------------------------------
def _make_kernel(hidden, n_acts, act_pad, out_lanes):
    """Fused two-branch actor kernel (n_acts = (n_ctrl, n_com))."""
    H = hidden
    P = act_pad
    H2, H4 = 2 * H, 4 * H
    eps = 1e-5

    def norm_full(x):
        mu = jnp.mean(x, axis=-1, keepdims=True)
        d = x - mu
        var = jnp.mean(d * d, axis=-1, keepdims=True)
        return d * jax.lax.rsqrt(var + eps)

    def norm_halves(x):
        # LayerNorm (affine already folded into the next weight) applied
        # independently to the ctrl lanes [:H] and com lanes [H:] of one vreg.
        left = jax.lax.broadcasted_iota(jnp.int32, x.shape, 1) < H
        mu = jnp.where(left,
                       jnp.mean(x[:, :H], axis=-1, keepdims=True),
                       jnp.mean(x[:, H:], axis=-1, keepdims=True))
        d = x - mu
        var = jnp.where(left,
                        jnp.mean(d[:, :H] * d[:, :H], axis=-1, keepdims=True),
                        jnp.mean(d[:, H:] * d[:, H:], axis=-1, keepdims=True))
        return d * jax.lax.rsqrt(var + eps)

    def kernel(obs_ref, masks_ref, rnn_ref, bias_ref,
               w1_ref, w2_ref, wih_ref, whh_ref, wa_ref,
               al_ref, hout_ref):
        obs = obs_ref[...]          # (B, OBS)
        msk = masks_ref[...]        # (B, 1)
        h0 = rnn_ref[...]           # (B, 2H) lane-packed [h_ctrl | h_com]

        # ---- MLPBase (both branches lane-packed, LN affines folded) ----
        x = norm_full(obs)
        x = jnp.maximum(
            jnp.dot(x, w1_ref[...], preferred_element_type=jnp.float32)
            + bias_ref[0:1, :H2], 0.0)
        x = norm_halves(x)
        x = jnp.maximum(
            jnp.dot(x, w2_ref[...], preferred_element_type=jnp.float32)
            + bias_ref[1:2, :H2], 0.0)
        x = norm_halves(x)

        # ---- single-step GRU, block-diag gate-major weights ----
        # gate layout along lanes: [r_ctrl|r_com, z_ctrl|z_com, n_ctrl|n_com]
        h = h0 * msk
        gi = (jnp.dot(x, wih_ref[...], preferred_element_type=jnp.float32)
              + bias_ref[2:3, :])
        gh = (jnp.dot(h, whh_ref[...], preferred_element_type=jnp.float32)
              + bias_ref[3:4, :])
        rz = jax.nn.sigmoid(gi[:, :H4] + gh[:, :H4])      # one 256-lane sigmoid
        r = rz[:, :H2]
        z = rz[:, H2:]
        n = jnp.tanh(gi[:, H4:] + r * gh[:, H4:])
        h_new = (1.0 - z) * n + z * h                      # (B, 2H) lane-packed
        hout_ref[...] = h_new

        # ---- ACTLayer (post-GRU LN folded into wa), deterministic argmax ----
        feat = norm_halves(h_new)
        logits = (jnp.dot(feat, wa_ref[...], preferred_element_type=jnp.float32)
                  + bias_ref[4:5, :2 * P])                 # (B, 2P)

        acts, lps = [], []
        for c, A in enumerate(n_acts):                     # unrolled (2 branches)
            lg = logits[:, c * P:(c + 1) * P]
            col = jax.lax.broadcasted_iota(jnp.int32, lg.shape, 1)
            lg = jnp.where(col < A, lg, -1e30)             # mask padded lanes
            m = jnp.max(lg, axis=-1, keepdims=True)
            lse = jnp.log(jnp.sum(jnp.exp(lg - m), axis=-1, keepdims=True)) + m
            # first index attaining the max (torch argmax semantics)
            idx = jnp.min(jnp.where(lg == m, col, P), axis=-1, keepdims=True)
            acts.append(idx.astype(jnp.float32))
            lps.append(jnp.sum(jnp.where(col == idx, lg - lse, 0.0),
                               axis=-1, keepdims=True))

        # Lane-dense packed output: [a_ctrl, a_com, lp_ctrl, lp_com, 0, ...]
        oc = jax.lax.broadcasted_iota(jnp.int32, (obs.shape[0], out_lanes), 1)
        al_ref[...] = jnp.where(oc == 0, acts[0],
                      jnp.where(oc == 1, acts[1],
                      jnp.where(oc == 2, lps[0],
                      jnp.where(oc == 3, lps[1], 0.0))))

    return kernel


# ------------------------------- wrapper -------------------------------------
@functools.partial(jax.jit, static_argnames=("n_acts",), donate_argnums=(1,))
def r_actor_forward(obs, rnn_states, masks, packed, n_acts):
    """Mirrors R_Actor.forward (deterministic=True, available_actions=None)."""
    B, _ = obs.shape
    H2 = rnn_states.shape[-1]          # 2 * hidden (recurrent_N == 1)
    H = H2 // 2
    rnn2d = rnn_states.reshape(B, H2)

    kernel = _make_kernel(H, n_acts, ACT_PAD, OUT_LANES)
    vmem = pl.BlockSpec(memory_space=pltpu.MemorySpace.VMEM)
    al, hout = pl.pallas_call(
        kernel,
        out_shape=(
            jax.ShapeDtypeStruct((B, OUT_LANES), jnp.float32),
            jax.ShapeDtypeStruct((B, H2), jnp.float32),
        ),
        in_specs=[vmem] * 9,
        out_specs=(vmem, vmem),
        # new hidden state reuses the (donated) rnn-state input buffer (idx 2).
        input_output_aliases={2: 1},
    )(obs, masks, rnn2d, packed["bias"], packed["w1"], packed["w2"],
      packed["wih"], packed["whh"], packed["wa"])

    actions = al[:, 0:2].astype(jnp.int32)          # (B, 2)
    action_log_probs = al[:, 2:4]                   # (B, 2)
    new_rnn_states = hout[:, None, :]               # (B, 1, 2H)
    return actions, action_log_probs, new_rnn_states


# ---------------------- host-side parameter packing --------------------------
def pack_params(p_ctrl, p_com, obs_dim, hidden, n_acts, act_pad=ACT_PAD):
    """Fold LN affines into following weights, merge/block-diag both branches."""
    H = hidden
    P = act_pad
    ps = (p_ctrl, p_com)

    def fold(ln_g, ln_b, w, b):
        g = jnp.asarray(ln_g, jnp.float32)
        bb = jnp.asarray(ln_b, jnp.float32)
        w = jnp.asarray(w, jnp.float32)
        b = jnp.asarray(b, jnp.float32)
        return g[:, None] * w, bb @ w + b

    w1f, b1f, w2f, b2f, wihf, bihf, waf, baf = [], [], [], [], [], [], [], []
    for p in ps:
        w, b = fold(p["ln0_g"], p["ln0_b"], p["w1"], p["b1"]); w1f.append(w); b1f.append(b)
        w, b = fold(p["ln1_g"], p["ln1_b"], p["w2"], p["b2"]); w2f.append(w); b2f.append(b)
        w, b = fold(p["ln2_g"], p["ln2_b"], p["wih"], p["bih"]); wihf.append(w); bihf.append(b)
        w, b = fold(p["lng_g"], p["lng_b"], p["wa"], p["ba"]); waf.append(w); baf.append(b)

    # Layer 1: both branches share norm(obs) -> concat along N.
    w1m = jnp.concatenate(w1f, axis=1)                      # (OBS, 2H)
    b1m = jnp.concatenate(b1f)                              # (2H,)

    # Layer 2: block-diagonal.
    w2m = jnp.zeros((2 * H, 2 * H), jnp.float32)
    w2m = w2m.at[:H, :H].set(w2f[0]).at[H:, H:].set(w2f[1])
    b2m = jnp.concatenate(b2f)

    # GRU weights: block-diagonal, gate-major column layout
    # (col block = gate*2H + branch*H, gates ordered r, z, n as in torch GRU).
    def pack_gru(wf, bf):
        wm = jnp.zeros((2 * H, 6 * H), jnp.float32)
        bm = jnp.zeros((6 * H,), jnp.float32)
        for c in range(2):
            for g in range(3):
                c0 = g * 2 * H + c * H
                wm = wm.at[c * H:(c + 1) * H, c0:c0 + H].set(wf[c][:, g * H:(g + 1) * H])
                bm = bm.at[c0:c0 + H].set(bf[c][g * H:(g + 1) * H])
        return wm, bm

    wihm, bihm = pack_gru(wihf, bihf)
    whhm, bhhm = pack_gru(
        [jnp.asarray(p["whh"], jnp.float32) for p in ps],
        [jnp.asarray(p["bhh"], jnp.float32) for p in ps])

    # Action head: block-diagonal padded to P lanes per branch.
    wam = jnp.zeros((2 * H, 2 * P), jnp.float32)
    bam = jnp.zeros((2 * P,), jnp.float32)
    for c in range(2):
        A = n_acts[c]
        wam = wam.at[c * H:(c + 1) * H, c * P:c * P + A].set(waf[c])
        bam = bam.at[c * P:c * P + A].set(baf[c])

    # Remaining bias vectors packed into one small blob (rows read in-kernel).
    bias = jnp.zeros((8, 6 * H), jnp.float32)
    bias = bias.at[0, :2 * H].set(b1m)
    bias = bias.at[1, :2 * H].set(b2m)
    bias = bias.at[2, :].set(bihm)
    bias = bias.at[3, :].set(bhhm)
    bias = bias.at[4, :2 * P].set(bam)

    return {"bias": bias, "w1": w1m, "w2": w2m,
            "wih": wihm, "whh": whhm, "wa": wam}


# --------------------------- deterministic init -------------------------------
def init_branch_params(key, obs_dim, hidden, n_act):
    ks = jax.random.split(key, 12)
    s, sb = 0.1, 0.01
    rn = lambda k, shp, sc: (sc * jax.random.normal(k, shp)).astype(jnp.float32)
    return {
        "ln0_g": 1.0 + rn(ks[5], (obs_dim,), sb), "ln0_b": rn(ks[6], (obs_dim,), sb),
        "w1": rn(ks[0], (obs_dim, hidden), s), "b1": rn(ks[7], (hidden,), sb),
        "ln1_g": 1.0 + rn(ks[8], (hidden,), sb), "ln1_b": rn(ks[9], (hidden,), sb),
        "w2": rn(ks[1], (hidden, hidden), s), "b2": rn(ks[10], (hidden,), sb),
        "ln2_g": jnp.ones((hidden,), jnp.float32), "ln2_b": jnp.zeros((hidden,), jnp.float32),
        "wih": rn(ks[2], (hidden, 3 * hidden), s), "bih": rn(ks[11], (3 * hidden,), sb),
        "whh": rn(ks[3], (hidden, 3 * hidden), s), "bhh": jnp.zeros((3 * hidden,), jnp.float32),
        "lng_g": jnp.ones((hidden,), jnp.float32), "lng_b": jnp.zeros((hidden,), jnp.float32),
        "wa": rn(ks[4], (hidden, n_act), s), "ba": jnp.zeros((n_act,), jnp.float32),
    }


# ---------------------------- pure-JAX reference -------------------------------
def _ref_branch(obs, h0, masks, p):
    def ln(x, g, b):
        mu = x.mean(-1, keepdims=True)
        var = ((x - mu) ** 2).mean(-1, keepdims=True)
        return (x - mu) / jnp.sqrt(var + 1e-5) * g + b
    H = h0.shape[-1]
    x = ln(obs, p["ln0_g"], p["ln0_b"])
    x = ln(jnp.maximum(x @ p["w1"] + p["b1"], 0.0), p["ln1_g"], p["ln1_b"])
    x = ln(jnp.maximum(x @ p["w2"] + p["b2"], 0.0), p["ln2_g"], p["ln2_b"])
    h = h0 * masks
    gi = x @ p["wih"] + p["bih"]
    gh = h @ p["whh"] + p["bhh"]
    r = jax.nn.sigmoid(gi[:, :H] + gh[:, :H])
    z = jax.nn.sigmoid(gi[:, H:2 * H] + gh[:, H:2 * H])
    n = jnp.tanh(gi[:, 2 * H:] + r * gh[:, 2 * H:])
    h_new = (1.0 - z) * n + z * h
    feat = ln(h_new, p["lng_g"], p["lng_b"])
    logits = feat @ p["wa"] + p["ba"]
    a = jnp.argmax(logits, axis=-1, keepdims=True).astype(jnp.int32)
    lp = jnp.take_along_axis(jax.nn.log_softmax(logits, axis=-1), a, axis=-1)
    return a, lp, h_new


def _ref_forward(obs, rnn_states, masks, pc, pm, hidden):
    h_ctrl = rnn_states[:, 0, :hidden]
    h_com = rnn_states[:, 0, hidden:]
    a_c, lp_c, hn_c = _ref_branch(obs, h_ctrl, masks, pc)
    a_m, lp_m, hn_m = _ref_branch(obs, h_com, masks, pm)
    return (jnp.concatenate([a_c, a_m], -1),
            jnp.concatenate([lp_c, lp_m], -1),
            jnp.concatenate([hn_c, hn_m], -1)[:, None, :])


# --------------------------------- main ---------------------------------------
if __name__ == "__main__":
    B = 8            # batch (rollout threads * agents)
    OBS = 48         # flatdim(obs_space)
    HID = 64         # actor_hidden_size
    N_ACTS = (5, 3)  # (action_space[0].n, action_space[1].n)

    key = jax.random.PRNGKey(0)
    k_obs, k_rnn, k_msk, k_pc, k_pm = jax.random.split(key, 5)

    obs = jax.random.normal(k_obs, (B, OBS), dtype=jnp.float32)
    rnn_states = jax.random.normal(k_rnn, (B, 1, 2 * HID), dtype=jnp.float32)
    masks = (jax.random.uniform(k_msk, (B, 1)) > 0.2).astype(jnp.float32)

    params_ctrl = init_branch_params(k_pc, OBS, HID, N_ACTS[0])
    params_com = init_branch_params(k_pm, OBS, HID, N_ACTS[1])
    packed = pack_params(params_ctrl, params_com, OBS, HID, N_ACTS)

    # Reference BEFORE the kernel call: rnn_states is donated (consumed) below.
    with jax.default_matmul_precision("highest"):
        ref_a, ref_lp, ref_h = _ref_forward(
            obs, rnn_states, masks, params_ctrl, params_com, HID)
    jax.block_until_ready((ref_a, ref_lp, ref_h))

    actions, action_log_probs, new_rnn_states = r_actor_forward(
        obs, rnn_states, masks, packed, n_acts=N_ACTS)
    jax.block_until_ready((actions, action_log_probs, new_rnn_states))

    assert actions.shape == (B, 2) and actions.dtype == jnp.int32
    assert action_log_probs.shape == (B, 2)
    assert new_rnn_states.shape == (B, 1, 2 * HID)

    assert bool(jnp.all(actions == ref_a))
    assert bool(jnp.allclose(action_log_probs, ref_lp, atol=1e-3, rtol=1e-3))
    assert bool(jnp.allclose(new_rnn_states, ref_h, atol=1e-3, rtol=1e-3))

    print("KERNEL_OK")
</pallas_src>

<mosaic_0001>
module attributes {stable_mosaic.version = 11 : i64} {
  func.func @kernel(%arg0: memref<8x48xf32, #tpu.memory_space<vmem>>, %arg1: memref<8x1xf32, #tpu.memory_space<vmem>>, %arg2: memref<8x128xf32, #tpu.memory_space<vmem>>, %arg3: memref<8x384xf32, #tpu.memory_space<vmem>>, %arg4: memref<48x128xf32, #tpu.memory_space<vmem>>, %arg5: memref<128x128xf32, #tpu.memory_space<vmem>>, %arg6: memref<128x384xf32, #tpu.memory_space<vmem>>, %arg7: memref<128x384xf32, #tpu.memory_space<vmem>>, %arg8: memref<128x128xf32, #tpu.memory_space<vmem>>, %arg9: memref<8x128xf32, #tpu.memory_space<vmem>>, %arg10: memref<8x128xf32, #tpu.memory_space<vmem>>) attributes {dimension_semantics = [], scalar_prefetch = 0 : i64, scratch_operands = 0 : i64, tpu.core_type = #tpu.core_type<tc>} {
    %c0 = arith.constant 0 : index
    %c0_0 = arith.constant 0 : index
    %0 = vector.load %arg0[%c0, %c0_0] : memref<8x48xf32, #tpu.memory_space<vmem>>, vector<8x48xf32>
    %c0_1 = arith.constant 0 : index
    %c0_2 = arith.constant 0 : index
    %1 = vector.load %arg1[%c0_1, %c0_2] : memref<8x1xf32, #tpu.memory_space<vmem>>, vector<8x1xf32>
    %c0_3 = arith.constant 0 : index
    %c0_4 = arith.constant 0 : index
    %2 = vector.load %arg2[%c0_3, %c0_4] : memref<8x128xf32, #tpu.memory_space<vmem>>, vector<8x128xf32>
    %cst = arith.constant dense<0.000000e+00> : vector<8xf32>
    %3 = vector.multi_reduction <add>, %0, %cst [1] : vector<8x48xf32> to vector<8xf32>
    %4 = vector.shape_cast %3 : vector<8xf32> to vector<8x1xf32>
    %cst_5 = arith.constant 4.800000e+01 : f32
    %5 = vector.broadcast %cst_5 : f32 to vector<8x1xf32>
    %6 = arith.divf %4, %5 : vector<8x1xf32>
    %7 = vector.broadcast %6 : vector<8x1xf32> to vector<8x48xf32>
    %8 = arith.subf %0, %7 : vector<8x48xf32>
    %9 = arith.mulf %8, %8 : vector<8x48xf32>
    %cst_6 = arith.constant dense<0.000000e+00> : vector<8xf32>
    %10 = vector.multi_reduction <add>, %9, %cst_6 [1] : vector<8x48xf32> to vector<8xf32>
    %11 = vector.shape_cast %10 : vector<8xf32> to vector<8x1xf32>
    %cst_7 = arith.constant 4.800000e+01 : f32
    %12 = vector.broadcast %cst_7 : f32 to vector<8x1xf32>
    %13 = arith.divf %11, %12 : vector<8x1xf32>
    %cst_8 = arith.constant 9.99999974E-6 : f32
    %14 = vector.broadcast %cst_8 : f32 to vector<8x1xf32>
    %15 = arith.addf %13, %14 : vector<8x1xf32>
    %16 = math.rsqrt %15 : vector<8x1xf32>
    %17 = vector.broadcast %16 : vector<8x1xf32> to vector<8x48xf32>
    %18 = arith.mulf %8, %17 : vector<8x48xf32>
    %c0_9 = arith.constant 0 : index
    %c0_10 = arith.constant 0 : index
    %19 = vector.load %arg4[%c0_9, %c0_10] : memref<48x128xf32, #tpu.memory_space<vmem>>, vector<48x128xf32>
    %cst_11 = arith.constant dense<0.000000e+00> : vector<8x128xf32>
    %20 = tpu.matmul %18, %19, %cst_11 {dimension_numbers = #tpu.dot_dimension_numbers<[1], [0], [0], [1], [0, 0, 1, 1], [], []>} : vector<8x48xf32>, vector<48x128xf32>, vector<8x128xf32> -> vector<8x128xf32>
    %c0_12 = arith.constant 0 : index
    %c0_13 = arith.constant 0 : index
    %21 = vector.load %arg3[%c0_12, %c0_13] : memref<8x384xf32, #tpu.memory_space<vmem>>, vector<1x128xf32>
    %22 = vector.broadcast %21 : vector<1x128xf32> to vector<8x128xf32>
    %23 = arith.addf %20, %22 : vector<8x128xf32>
    %cst_14 = arith.constant 0.000000e+00 : f32
    %24 = vector.broadcast %cst_14 : f32 to vector<8x128xf32>
    %25 = arith.maximumf %23, %24 : vector<8x128xf32>
    %26 = tpu.iota {dimensions = array<i32: 1>} : vector<8x128xi32>
    %c64_i32 = arith.constant 64 : i32
    %27 = vector.broadcast %c64_i32 : i32 to vector<8x128xi32>
    %28 = arith.cmpi slt, %26, %27 : vector<8x128xi32>
    %29 = vector.extract_strided_slice %25 {offsets = [0, 0], sizes = [8, 64], strides = [1, 1]} : vector<8x128xf32> to vector<8x64xf32>
    %cst_15 = arith.constant dense<0.000000e+00> : vector<8xf32>
    %30 = vector.multi_reduction <add>, %29, %cst_15 [1] : vector<8x64xf32> to vector<8xf32>
    %31 = vector.shape_cast %30 : vector<8xf32> to vector<8x1xf32>
    %cst_16 = arith.constant 6.400000e+01 : f32
    %32 = vector.broadcast %cst_16 : f32 to vector<8x1xf32>
    %33 = arith.divf %31, %32 : vector<8x1xf32>
    %34 = vector.extract_strided_slice %25 {offsets = [0, 64], sizes = [8, 64], strides = [1, 1]} : vector<8x128xf32> to vector<8x64xf32>
    %cst_17 = arith.constant dense<0.000000e+00> : vector<8xf32>
    %35 = vector.multi_reduction <add>, %34, %cst_17 [1] : vector<8x64xf32> to vector<8xf32>
    %36 = vector.shape_cast %35 : vector<8xf32> to vector<8x1xf32>
    %cst_18 = arith.constant 6.400000e+01 : f32
    %37 = vector.broadcast %cst_18 : f32 to vector<8x1xf32>
    %38 = arith.divf %36, %37 : vector<8x1xf32>
    %39 = vector.shape_cast %33 : vector<8x1xf32> to vector<8x1xf32>
    %40 = vector.broadcast %39 : vector<8x1xf32> to vector<8x128xf32>
    %41 = vector.shape_cast %38 : vector<8x1xf32> to vector<8x1xf32>
    %42 = vector.broadcast %41 : vector<8x1xf32> to vector<8x128xf32>
    %43 = arith.select %28, %40, %42 : vector<8x128xi1>, vector<8x128xf32>
    %44 = arith.subf %25, %43 : vector<8x128xf32>
    %45 = vector.extract_strided_slice %44 {offsets = [0, 0], sizes = [8, 64], strides = [1, 1]} : vector<8x128xf32> to vector<8x64xf32>
    %46 = vector.extract_strided_slice %44 {offsets = [0, 0], sizes = [8, 64], strides = [1, 1]} : vector<8x128xf32> to vector<8x64xf32>
    %47 = arith.mulf %45, %46 : vector<8x64xf32>
    %cst_19 = arith.constant dense<0.000000e+00> : vector<8xf32>
    %48 = vector.multi_reduction <add>, %47, %cst_19 [1] : vector<8x64xf32> to vector<8xf32>
    %49 = vector.shape_cast %48 : vector<8xf32> to vector<8x1xf32>
    %cst_20 = arith.constant 6.400000e+01 : f32
    %50 = vector.broadcast %cst_20 : f32 to vector<8x1xf32>
    %51 = arith.divf %49, %50 : vector<8x1xf32>
    %52 = vector.extract_strided_slice %44 {offsets = [0, 64], sizes = [8, 64], strides = [1, 1]} : vector<8x128xf32> to vector<8x64xf32>
    %53 = vector.extract_strided_slice %44 {offsets = [0, 64], sizes = [8, 64], strides = [1, 1]} : vector<8x128xf32> to vector<8x64xf32>
    %54 = arith.mulf %52, %53 : vector<8x64xf32>
    %cst_21 = arith.constant dense<0.000000e+00> : vector<8xf32>
    %55 = vector.multi_reduction <add>, %54, %cst_21 [1] : vector<8x64xf32> to vector<8xf32>
    %56 = vector.shape_cast %55 : vector<8xf32> to vector<8x1xf32>
    %cst_22 = arith.constant 6.400000e+01 : f32
    %57 = vector.broadcast %cst_22 : f32 to vector<8x1xf32>
    %58 = arith.divf %56, %57 : vector<8x1xf32>
    %59 = vector.shape_cast %51 : vector<8x1xf32> to vector<8x1xf32>
    %60 = vector.broadcast %59 : vector<8x1xf32> to vector<8x128xf32>
    %61 = vector.shape_cast %58 : vector<8x1xf32> to vector<8x1xf32>
    %62 = vector.broadcast %61 : vector<8x1xf32> to vector<8x128xf32>
    %63 = arith.select %28, %60, %62 : vector<8x128xi1>, vector<8x128xf32>
    %cst_23 = arith.constant 9.99999974E-6 : f32
    %64 = vector.broadcast %cst_23 : f32 to vector<8x128xf32>
    %65 = arith.addf %63, %64 : vector<8x128xf32>
    %66 = math.rsqrt %65 : vector<8x128xf32>
    %67 = arith.mulf %44, %66 : vector<8x128xf32>
    %c0_24 = arith.constant 0 : index
    %c0_25 = arith.constant 0 : index
    %68 = vector.load %arg5[%c0_24, %c0_25] : memref<128x128xf32, #tpu.memory_space<vmem>>, vector<128x128xf32>
    %cst_26 = arith.constant dense<0.000000e+00> : vector<8x128xf32>
    %69 = tpu.matmul %67, %68, %cst_26 {dimension_numbers = #tpu.dot_dimension_numbers<[1], [0], [0], [1], [0, 0, 1, 1], [], []>} : vector<8x128xf32>, vector<128x128xf32>, vector<8x128xf32> -> vector<8x128xf32>
    %c1 = arith.constant 1 : index
    %c0_27 = arith.constant 0 : index
    %70 = vector.load %arg3[%c1, %c0_27] : memref<8x384xf32, #tpu.memory_space<vmem>>, vector<1x128xf32>
    %71 = vector.broadcast %70 : vector<1x128xf32> to vector<8x128xf32>
    %72 = arith.addf %69, %71 : vector<8x128xf32>
    %cst_28 = arith.constant 0.000000e+00 : f32
    %73 = vector.broadcast %cst_28 : f32 to vector<8x128xf32>
    %74 = arith.maximumf %72, %73 : vector<8x128xf32>
    %75 = tpu.iota {dimensions = array<i32: 1>} : vector<8x128xi32>
    %c64_i32_29 = arith.constant 64 : i32
    %76 = vector.broadcast %c64_i32_29 : i32 to vector<8x128xi32>
    %77 = arith.cmpi slt, %75, %76 : vector<8x128xi32>
    %78 = vector.extract_strided_slice %74 {offsets = [0, 0], sizes = [8, 64], strides = [1, 1]} : vector<8x128xf32> to vector<8x64xf32>
    %cst_30 = arith.constant dense<0.000000e+00> : vector<8xf32>
    %79 = vector.multi_reduction <add>, %78, %cst_30 [1] : vector<8x64xf32> to vector<8xf32>
    %80 = vector.shape_cast %79 : vector<8xf32> to vector<8x1xf32>
    %cst_31 = arith.constant 6.400000e+01 : f32
    %81 = vector.broadcast %cst_31 : f32 to vector<8x1xf32>
    %82 = arith.divf %80, %81 : vector<8x1xf32>
    %83 = vector.extract_strided_slice %74 {offsets = [0, 64], sizes = [8, 64], strides = [1, 1]} : vector<8x128xf32> to vector<8x64xf32>
    %cst_32 = arith.constant dense<0.000000e+00> : vector<8xf32>
    %84 = vector.multi_reduction <add>, %83, %cst_32 [1] : vector<8x64xf32> to vector<8xf32>
    %85 = vector.shape_cast %84 : vector<8xf32> to vector<8x1xf32>
    %cst_33 = arith.constant 6.400000e+01 : f32
    %86 = vector.broadcast %cst_33 : f32 to vector<8x1xf32>
    %87 = arith.divf %85, %86 : vector<8x1xf32>
    %88 = vector.shape_cast %82 : vector<8x1xf32> to vector<8x1xf32>
    %89 = vector.broadcast %88 : vector<8x1xf32> to vector<8x128xf32>
    %90 = vector.shape_cast %87 : vector<8x1xf32> to vector<8x1xf32>
    %91 = vector.broadcast %90 : vector<8x1xf32> to vector<8x128xf32>
    %92 = arith.select %77, %89, %91 : vector<8x128xi1>, vector<8x128xf32>
    %93 = arith.subf %74, %92 : vector<8x128xf32>
    %94 = vector.extract_strided_slice %93 {offsets = [0, 0], sizes = [8, 64], strides = [1, 1]} : vector<8x128xf32> to vector<8x64xf32>
    %95 = vector.extract_strided_slice %93 {offsets = [0, 0], sizes = [8, 64], strides = [1, 1]} : vector<8x128xf32> to vector<8x64xf32>
    %96 = arith.mulf %94, %95 : vector<8x64xf32>
    %cst_34 = arith.constant dense<0.000000e+00> : vector<8xf32>
    %97 = vector.multi_reduction <add>, %96, %cst_34 [1] : vector<8x64xf32> to vector<8xf32>
    %98 = vector.shape_cast %97 : vector<8xf32> to vector<8x1xf32>
    %cst_35 = arith.constant 6.400000e+01 : f32
    %99 = vector.broadcast %cst_35 : f32 to vector<8x1xf32>
    %100 = arith.divf %98, %99 : vector<8x1xf32>
    %101 = vector.extract_strided_slice %93 {offsets = [0, 64], sizes = [8, 64], strides = [1, 1]} : vector<8x128xf32> to vector<8x64xf32>
    %102 = vector.extract_strided_slice %93 {offsets = [0, 64], sizes = [8, 64], strides = [1, 1]} : vector<8x128xf32> to vector<8x64xf32>
    %103 = arith.mulf %101, %102 : vector<8x64xf32>
    %cst_36 = arith.constant dense<0.000000e+00> : vector<8xf32>
    %104 = vector.multi_reduction <add>, %103, %cst_36 [1] : vector<8x64xf32> to vector<8xf32>
    %105 = vector.shape_cast %104 : vector<8xf32> to vector<8x1xf32>
    %cst_37 = arith.constant 6.400000e+01 : f32
    %106 = vector.broadcast %cst_37 : f32 to vector<8x1xf32>
    %107 = arith.divf %105, %106 : vector<8x1xf32>
    %108 = vector.shape_cast %100 : vector<8x1xf32> to vector<8x1xf32>
    %109 = vector.broadcast %108 : vector<8x1xf32> to vector<8x128xf32>
    %110 = vector.shape_cast %107 : vector<8x1xf32> to vector<8x1xf32>
    %111 = vector.broadcast %110 : vector<8x1xf32> to vector<8x128xf32>
    %112 = arith.select %77, %109, %111 : vector<8x128xi1>, vector<8x128xf32>
    %cst_38 = arith.constant 9.99999974E-6 : f32
    %113 = vector.broadcast %cst_38 : f32 to vector<8x128xf32>
    %114 = arith.addf %112, %113 : vector<8x128xf32>
    %115 = math.rsqrt %114 : vector<8x128xf32>
    %116 = arith.mulf %93, %115 : vector<8x128xf32>
    %117 = vector.broadcast %1 : vector<8x1xf32> to vector<8x128xf32>
    %118 = arith.mulf %2, %117 : vector<8x128xf32>
    %c0_39 = arith.constant 0 : index
    %c0_40 = arith.constant 0 : index
    %119 = vector.load %arg6[%c0_39, %c0_40] : memref<128x384xf32, #tpu.memory_space<vmem>>, vector<128x384xf32>
    %cst_41 = arith.constant dense<0.000000e+00> : vector<8x384xf32>
    %120 = tpu.matmul %116, %119, %cst_41 {dimension_numbers = #tpu.dot_dimension_numbers<[1], [0], [0], [1], [0, 0, 1, 1], [], []>} : vector<8x128xf32>, vector<128x384xf32>, vector<8x384xf32> -> vector<8x384xf32>
    %c2 = arith.constant 2 : index
    %c0_42 = arith.constant 0 : index
    %121 = vector.load %arg3[%c2, %c0_42] : memref<8x384xf32, #tpu.memory_space<vmem>>, vector<1x384xf32>
    %122 = vector.broadcast %121 : vector<1x384xf32> to vector<8x384xf32>
    %123 = arith.addf %120, %122 : vector<8x384xf32>
    %c0_43 = arith.constant 0 : index
    %c0_44 = arith.constant 0 : index
    %124 = vector.load %arg7[%c0_43, %c0_44] : memref<128x384xf32, #tpu.memory_space<vmem>>, vector<128x384xf32>
    %cst_45 = arith.constant dense<0.000000e+00> : vector<8x384xf32>
    %125 = tpu.matmul %118, %124, %cst_45 {dimension_numbers = #tpu.dot_dimension_numbers<[1], [0], [0], [1], [0, 0, 1, 1], [], []>} : vector<8x128xf32>, vector<128x384xf32>, vector<8x384xf32> -> vector<8x384xf32>
    %c3 = arith.constant 3 : index
    %c0_46 = arith.constant 0 : index
    %126 = vector.load %arg3[%c3, %c0_46] : memref<8x384xf32, #tpu.memory_space<vmem>>, vector<1x384xf32>
    %127 = vector.broadcast %126 : vector<1x384xf32> to vector<8x384xf32>
    %128 = arith.addf %125, %127 : vector<8x384xf32>
    %129 = vector.extract_strided_slice %123 {offsets = [0, 0], sizes = [8, 256], strides = [1, 1]} : vector<8x384xf32> to vector<8x256xf32>
    %130 = vector.extract_strided_slice %128 {offsets = [0, 0], sizes = [8, 256], strides = [1, 1]} : vector<8x384xf32> to vector<8x256xf32>
    %131 = arith.addf %129, %130 : vector<8x256xf32>
    %132 = arith.negf %131 : vector<8x256xf32>
    %133 = math.exp %132 : vector<8x256xf32>
    %cst_47 = arith.constant 1.000000e+00 : f32
    %134 = vector.broadcast %cst_47 : f32 to vector<8x256xf32>
    %135 = arith.addf %134, %133 : vector<8x256xf32>
    %136 = arith.divf %134, %135 : vector<8x256xf32>
    %137 = vector.extract_strided_slice %136 {offsets = [0, 0], sizes = [8, 128], strides = [1, 1]} : vector<8x256xf32> to vector<8x128xf32>
    %138 = vector.extract_strided_slice %136 {offsets = [0, 128], sizes = [8, 128], strides = [1, 1]} : vector<8x256xf32> to vector<8x128xf32>
    %139 = vector.extract_strided_slice %123 {offsets = [0, 256], sizes = [8, 128], strides = [1, 1]} : vector<8x384xf32> to vector<8x128xf32>
    %140 = vector.extract_strided_slice %128 {offsets = [0, 256], sizes = [8, 128], strides = [1, 1]} : vector<8x384xf32> to vector<8x128xf32>
    %141 = arith.mulf %137, %140 : vector<8x128xf32>
    %142 = arith.addf %139, %141 : vector<8x128xf32>
    %143 = math.tanh %142 : vector<8x128xf32>
    %cst_48 = arith.constant 1.000000e+00 : f32
    %144 = vector.broadcast %cst_48 : f32 to vector<8x128xf32>
    %145 = arith.subf %144, %138 : vector<8x128xf32>
    %146 = arith.mulf %145, %143 : vector<8x128xf32>
    %147 = arith.mulf %138, %118 : vector<8x128xf32>
    %148 = arith.addf %146, %147 : vector<8x128xf32>
    %c0_49 = arith.constant 0 : index
    %c0_50 = arith.constant 0 : index
    %149 = vector.load %arg10[%c0_49, %c0_50] : memref<8x128xf32, #tpu.memory_space<vmem>>, vector<8x128xf32>
    tpu.vector_store %arg10[%c0_49, %c0_50], %148 {strides = array<i32>} : memref<8x128xf32, #tpu.memory_space<vmem>>, vector<8x128xf32>,
    %150 = tpu.iota {dimensions = array<i32: 1>} : vector<8x128xi32>
    %c64_i32_51 = arith.constant 64 : i32
    %151 = vector.broadcast %c64_i32_51 : i32 to vector<8x128xi32>
    %152 = arith.cmpi slt, %150, %151 : vector<8x128xi32>
    %153 = vector.extract_strided_slice %148 {offsets = [0, 0], sizes = [8, 64], strides = [1, 1]} : vector<8x128xf32> to vector<8x64xf32>
    %cst_52 = arith.constant dense<0.000000e+00> : vector<8xf32>
    %154 = vector.multi_reduction <add>, %153, %cst_52 [1] : vector<8x64xf32> to vector<8xf32>
    %155 = vector.shape_cast %154 : vector<8xf32> to vector<8x1xf32>
    %cst_53 = arith.constant 6.400000e+01 : f32
    %156 = vector.broadcast %cst_53 : f32 to vector<8x1xf32>
    %157 = arith.divf %155, %156 : vector<8x1xf32>
    %158 = vector.extract_strided_slice %148 {offsets = [0, 64], sizes = [8, 64], strides = [1, 1]} : vector<8x128xf32> to vector<8x64xf32>
    %cst_54 = arith.constant dense<0.000000e+00> : vector<8xf32>
    %159 = vector.multi_reduction <add>, %158, %cst_54 [1] : vector<8x64xf32> to vector<8xf32>
    %160 = vector.shape_cast %159 : vector<8xf32> to vector<8x1xf32>
    %cst_55 = arith.constant 6.400000e+01 : f32
    %161 = vector.broadcast %cst_55 : f32 to vector<8x1xf32>
    %162 = arith.divf %160, %161 : vector<8x1xf32>
    %163 = vector.shape_cast %157 : vector<8x1xf32> to vector<8x1xf32>
    %164 = vector.broadcast %163 : vector<8x1xf32> to vector<8x128xf32>
    %165 = vector.shape_cast %162 : vector<8x1xf32> to vector<8x1xf32>
    %166 = vector.broadcast %165 : vector<8x1xf32> to vector<8x128xf32>
    %167 = arith.select %152, %164, %166 : vector<8x128xi1>, vector<8x128xf32>
    %168 = arith.subf %148, %167 : vector<8x128xf32>
    %169 = vector.extract_strided_slice %168 {offsets = [0, 0], sizes = [8, 64], strides = [1, 1]} : vector<8x128xf32> to vector<8x64xf32>
    %170 = vector.extract_strided_slice %168 {offsets = [0, 0], sizes = [8, 64], strides = [1, 1]} : vector<8x128xf32> to vector<8x64xf32>
    %171 = arith.mulf %169, %170 : vector<8x64xf32>
    %cst_56 = arith.constant dense<0.000000e+00> : vector<8xf32>
    %172 = vector.multi_reduction <add>, %171, %cst_56 [1] : vector<8x64xf32> to vector<8xf32>
    %173 = vector.shape_cast %172 : vector<8xf32> to vector<8x1xf32>
    %cst_57 = arith.constant 6.400000e+01 : f32
    %174 = vector.broadcast %cst_57 : f32 to vector<8x1xf32>
    %175 = arith.divf %173, %174 : vector<8x1xf32>
    %176 = vector.extract_strided_slice %168 {offsets = [0, 64], sizes = [8, 64], strides = [1, 1]} : vector<8x128xf32> to vector<8x64xf32>
    %177 = vector.extract_strided_slice %168 {offsets = [0, 64], sizes = [8, 64], strides = [1, 1]} : vector<8x128xf32> to vector<8x64xf32>
    %178 = arith.mulf %176, %177 : vector<8x64xf32>
    %cst_58 = arith.constant dense<0.000000e+00> : vector<8xf32>
    %179 = vector.multi_reduction <add>, %178, %cst_58 [1] : vector<8x64xf32> to vector<8xf32>
    %180 = vector.shape_cast %179 : vector<8xf32> to vector<8x1xf32>
    %cst_59 = arith.constant 6.400000e+01 : f32
    %181 = vector.broadcast %cst_59 : f32 to vector<8x1xf32>
    %182 = arith.divf %180, %181 : vector<8x1xf32>
    %183 = vector.shape_cast %175 : vector<8x1xf32> to vector<8x1xf32>
    %184 = vector.broadcast %183 : vector<8x1xf32> to vector<8x128xf32>
    %185 = vector.shape_cast %182 : vector<8x1xf32> to vector<8x1xf32>
    %186 = vector.broadcast %185 : vector<8x1xf32> to vector<8x128xf32>
    %187 = arith.select %152, %184, %186 : vector<8x128xi1>, vector<8x128xf32>
    %cst_60 = arith.constant 9.99999974E-6 : f32
    %188 = vector.broadcast %cst_60 : f32 to vector<8x128xf32>
    %189 = arith.addf %187, %188 : vector<8x128xf32>
    %190 = math.rsqrt %189 : vector<8x128xf32>
    %191 = arith.mulf %168, %190 : vector<8x128xf32>
    %c0_61 = arith.constant 0 : index
    %c0_62 = arith.constant 0 : index
    %192 = vector.load %arg8[%c0_61, %c0_62] : memref<128x128xf32, #tpu.memory_space<vmem>>, vector<128x128xf32>
    %cst_63 = arith.constant dense<0.000000e+00> : vector<8x128xf32>
    %193 = tpu.matmul %191, %192, %cst_63 {dimension_numbers = #tpu.dot_dimension_numbers<[1], [0], [0], [1], [0, 0, 1, 1], [], []>} : vector<8x128xf32>, vector<128x128xf32>, vector<8x128xf32> -> vector<8x128xf32>
    %c4 = arith.constant 4 : index
    %c0_64 = arith.constant 0 : index
    %194 = vector.load %arg3[%c4, %c0_64] : memref<8x384xf32, #tpu.memory_space<vmem>>, vector<1x128xf32>
    %195 = vector.broadcast %194 : vector<1x128xf32> to vector<8x128xf32>
    %196 = arith.addf %193, %195 : vector<8x128xf32>
    %197 = vector.extract_strided_slice %196 {offsets = [0, 0], sizes = [8, 64], strides = [1, 1]} : vector<8x128xf32> to vector<8x64xf32>
    %198 = tpu.iota {dimensions = array<i32: 1>} : vector<8x64xi32>
    %c5_i32 = arith.constant 5 : i32
    %199 = vector.broadcast %c5_i32 : i32 to vector<8x64xi32>
    %200 = arith.cmpi slt, %198, %199 : vector<8x64xi32>
    %cst_65 = arith.constant -1.000000e+30 : f32
    %201 = vector.broadcast %cst_65 : f32 to vector<8x64xf32>
    %202 = arith.select %200, %197, %201 : vector<8x64xi1>, vector<8x64xf32>
    %cst_66 = arith.constant dense<0xFF800000> : vector<8xf32>
    %203 = vector.multi_reduction <maximumf>, %202, %cst_66 [1] : vector<8x64xf32> to vector<8xf32>
    %204 = vector.shape_cast %203 : vector<8xf32> to vector<8x1xf32>
    %205 = vector.broadcast %204 : vector<8x1xf32> to vector<8x64xf32>
    %206 = arith.subf %202, %205 : vector<8x64xf32>
    %207 = math.exp %206 : vector<8x64xf32>
    %cst_67 = arith.constant dense<0.000000e+00> : vector<8xf32>
    %208 = vector.multi_reduction <add>, %207, %cst_67 [1] : vector<8x64xf32> to vector<8xf32>
    %209 = vector.shape_cast %208 : vector<8xf32> to vector<8x1xf32>
    %210 = math.log %209 : vector<8x1xf32>
    %211 = arith.addf %210, %204 : vector<8x1xf32>
    %212 = vector.broadcast %204 : vector<8x1xf32> to vector<8x64xf32>
    %213 = arith.cmpf oeq, %202, %212 : vector<8x64xf32>
    %c64_i32_68 = arith.constant 64 : i32
    %214 = vector.broadcast %c64_i32_68 : i32 to vector<8x64xi32>
    %215 = arith.select %213, %198, %214 : vector<8x64xi1>, vector<8x64xi32>
    %cst_69 = arith.constant dense<2147483647> : vector<8xi32>
    %216 = vector.multi_reduction <minsi>, %215, %cst_69 [1] : vector<8x64xi32> to vector<8xi32>
    %217 = vector.shape_cast %216 : vector<8xi32> to vector<8x1xi32>
    %218 = arith.sitofp %217 : vector<8x1xi32> to vector<8x1xf32>
    %219 = vector.broadcast %217 : vector<8x1xi32> to vector<8x64xi32>
    %220 = arith.cmpi eq, %198, %219 : vector<8x64xi32>
    %221 = vector.broadcast %211 : vector<8x1xf32> to vector<8x64xf32>
    %222 = arith.subf %202, %221 : vector<8x64xf32>
    %cst_70 = arith.constant 0.000000e+00 : f32
    %223 = vector.broadcast %cst_70 : f32 to vector<8x64xf32>
    %224 = arith.select %220, %222, %223 : vector<8x64xi1>, vector<8x64xf32>
    %cst_71 = arith.constant dense<0.000000e+00> : vector<8xf32>
    %225 = vector.multi_reduction <add>, %224, %cst_71 [1] : vector<8x64xf32> to vector<8xf32>
    %226 = vector.shape_cast %225 : vector<8xf32> to vector<8x1xf32>
    %227 = vector.extract_strided_slice %196 {offsets = [0, 64], sizes = [8, 64], strides = [1, 1]} : vector<8x128xf32> to vector<8x64xf32>
    %228 = tpu.iota {dimensions = array<i32: 1>} : vector<8x64xi32>
    %c3_i32 = arith.constant 3 : i32
    %229 = vector.broadcast %c3_i32 : i32 to vector<8x64xi32>
    %230 = arith.cmpi slt, %228, %229 : vector<8x64xi32>
    %cst_72 = arith.constant -1.000000e+30 : f32
    %231 = vector.broadcast %cst_72 : f32 to vector<8x64xf32>
    %232 = arith.select %230, %227, %231 : vector<8x64xi1>, vector<8x64xf32>
    %cst_73 = arith.constant dense<0xFF800000> : vector<8xf32>
    %233 = vector.multi_reduction <maximumf>, %232, %cst_73 [1] : vector<8x64xf32> to vector<8xf32>
    %234 = vector.shape_cast %233 : vector<8xf32> to vector<8x1xf32>
    %235 = vector.broadcast %234 : vector<8x1xf32> to vector<8x64xf32>
    %236 = arith.subf %232, %235 : vector<8x64xf32>
    %237 = math.exp %236 : vector<8x64xf32>
    %cst_74 = arith.constant dense<0.000000e+00> : vector<8xf32>
    %238 = vector.multi_reduction <add>, %237, %cst_74 [1] : vector<8x64xf32> to vector<8xf32>
    %239 = vector.shape_cast %238 : vector<8xf32> to vector<8x1xf32>
    %240 = math.log %239 : vector<8x1xf32>
    %241 = arith.addf %240, %234 : vector<8x1xf32>
    %242 = vector.broadcast %234 : vector<8x1xf32> to vector<8x64xf32>
    %243 = arith.cmpf oeq, %232, %242 : vector<8x64xf32>
    %c64_i32_75 = arith.constant 64 : i32
    %244 = vector.broadcast %c64_i32_75 : i32 to vector<8x64xi32>
    %245 = arith.select %243, %228, %244 : vector<8x64xi1>, vector<8x64xi32>
    %cst_76 = arith.constant dense<2147483647> : vector<8xi32>
    %246 = vector.multi_reduction <minsi>, %245, %cst_76 [1] : vector<8x64xi32> to vector<8xi32>
    %247 = vector.shape_cast %246 : vector<8xi32> to vector<8x1xi32>
    %248 = arith.sitofp %247 : vector<8x1xi32> to vector<8x1xf32>
    %249 = vector.broadcast %247 : vector<8x1xi32> to vector<8x64xi32>
    %250 = arith.cmpi eq, %228, %249 : vector<8x64xi32>
    %251 = vector.broadcast %241 : vector<8x1xf32> to vector<8x64xf32>
    %252 = arith.subf %232, %251 : vector<8x64xf32>
    %cst_77 = arith.constant 0.000000e+00 : f32
    %253 = vector.broadcast %cst_77 : f32 to vector<8x64xf32>
    %254 = arith.select %250, %252, %253 : vector<8x64xi1>, vector<8x64xf32>
    %cst_78 = arith.constant dense<0.000000e+00> : vector<8xf32>
    %255 = vector.multi_reduction <add>, %254, %cst_78 [1] : vector<8x64xf32> to vector<8xf32>
    %256 = vector.shape_cast %255 : vector<8xf32> to vector<8x1xf32>
    %257 = tpu.iota {dimensions = array<i32: 1>} : vector<8x128xi32>
    %c0_i32 = arith.constant 0 : i32
    %258 = vector.broadcast %c0_i32 : i32 to vector<8x128xi32>
    %259 = arith.cmpi eq, %257, %258 : vector<8x128xi32>
    %c1_i32 = arith.constant 1 : i32
    %260 = vector.broadcast %c1_i32 : i32 to vector<8x128xi32>
    %261 = arith.cmpi eq, %257, %260 : vector<8x128xi32>
    %c2_i32 = arith.constant 2 : i32
    %262 = vector.broadcast %c2_i32 : i32 to vector<8x128xi32>
    %263 = arith.cmpi eq, %257, %262 : vector<8x128xi32>
    %c3_i32_79 = arith.constant 3 : i32
    %264 = vector.broadcast %c3_i32_79 : i32 to vector<8x128xi32>
    %265 = arith.cmpi eq, %257, %264 : vector<8x128xi32>
    %cst_80 = arith.constant 0.000000e+00 : f32
    %266 = vector.shape_cast %256 : vector<8x1xf32> to vector<8x1xf32>
    %267 = vector.broadcast %266 : vector<8x1xf32> to vector<8x128xf32>
    %268 = vector.broadcast %cst_80 : f32 to vector<8x128xf32>
    %269 = arith.select %265, %267, %268 : vector<8x128xi1>, vector<8x128xf32>
    %270 = vector.shape_cast %226 : vector<8x1xf32> to vector<8x1xf32>
    %271 = vector.broadcast %270 : vector<8x1xf32> to vector<8x128xf32>
    %272 = arith.select %263, %271, %269 : vector<8x128xi1>, vector<8x128xf32>
    %273 = vector.shape_cast %248 : vector<8x1xf32> to vector<8x1xf32>
    %274 = vector.broadcast %273 : vector<8x1xf32> to vector<8x128xf32>
    %275 = arith.select %261, %274, %272 : vector<8x128xi1>, vector<8x128xf32>
    %276 = vector.shape_cast %218 : vector<8x1xf32> to vector<8x1xf32>
    %277 = vector.broadcast %276 : vector<8x1xf32> to vector<8x128xf32>
    %278 = arith.select %259, %277, %275 : vector<8x128xi1>, vector<8x128xf32>
    %c0_81 = arith.constant 0 : index
    %c0_82 = arith.constant 0 : index
    %279 = vector.load %arg9[%c0_81, %c0_82] : memref<8x128xf32, #tpu.memory_space<vmem>>, vector<8x128xf32>
    tpu.vector_store %arg9[%c0_81, %c0_82], %278 {strides = array<i32>} : memref<8x128xf32, #tpu.memory_space<vmem>>, vector<8x128xf32>,
    return
  }
}

</mosaic_0001>

<llo_original>
// kernel: r_actor_forward.1
$region0: #{r_actor_forward.1}
  #allocation0 [shape = 'u32[]', space=smem, size = 0x4, offset = 0x4, fixed_abs, tag = 'smem constant byte address 0x4 - core index']
  #allocation1 [shape = 'u32[144,128]{1,0:T(1,128)}', space=vmem, size = 0x12000, scoped, tag = 'internal scratch']
  %s0 = inlined_call_operand.hbm [shape: f32[8,48], index: 0, kind: input, shape index: {}]
  %s1 = inlined_call_operand.vmem [shape: f32[8,1], index: 1, kind: input, shape index: {}]
  %s2 = inlined_call_operand.hbm [shape: f32[8,128], index: 2, kind: input, shape index: {}, may-alias: {2,10}]
  %s3 = inlined_call_operand.vmem [shape: f32[8,384], index: 3, kind: input, shape index: {}]
  %s4 = inlined_call_operand.hbm [shape: f32[48,128], index: 4, kind: input, shape index: {}]
  %s5 = inlined_call_operand.hbm [shape: f32[128,128], index: 5, kind: input, shape index: {}]
  %s6 = inlined_call_operand.hbm [shape: f32[128,384], index: 6, kind: input, shape index: {}]
  %s7 = inlined_call_operand.hbm [shape: f32[128,384], index: 7, kind: input, shape index: {}]
  %s8 = inlined_call_operand.hbm [shape: f32[128,128], index: 8, kind: input, shape index: {}]
  %s9 = inlined_call_operand.vmem [shape: f32[8,128], index: 9, kind: output, shape index: {0}]
  %s10 = inlined_call_operand.hbm [shape: f32[8,128], index: 10, kind: output, shape index: {1}, may-alias: {2,10}]
  %11 = xla_tuple %s9, %s10
  %s12 = sld [smem:[#allocation0]]
  $region82: #{r_actor_forward.1} parent=0
    _
  %s14 = ssub.s32 1, %s12
  %s15 = scalar_select 0, %s14, %s12
  $region1: #{r_actor_forward.1} parent=0
    #allocation2 [shape = 'u8[4096]{0}', space=vmem, size = 0x1000, scoped, tag = 'input window, operand 0, single buffered']
    #allocation3 [shape = 's32[1]{0}', space=sflag, size = 0x4, scoped, tag = 'scoped memory for r_actor_forward.1']
    #allocation4 [shape = 's32[1]{0}', space=sflag, size = 0x4, scoped, tag = 'scoped memory for r_actor_forward.1']
    #allocation5 [shape = 'u8[4096]{0}', space=vmem, size = 0x1000, scoped, tag = 'input window, operand 2, single buffered']
    #allocation6 [shape = 's32[1]{0}', space=sflag, size = 0x4, scoped, tag = 'scoped memory for r_actor_forward.1']
    #allocation7 [shape = 'u8[24576]{0}', space=vmem, size = 0x6000, scoped, tag = 'input window, operand 4, single buffered']
    #allocation8 [shape = 'u8[65536]{0}', space=vmem, size = 0x10000, scoped, tag = 'input window, operand 5, single buffered']
    #allocation9 [shape = 's32[1]{0}', space=sflag, size = 0x4, scoped, tag = 'scoped memory for r_actor_forward.1']
    #allocation10 [shape = 'u8[196608]{0}', space=vmem, size = 0x30000, scoped, tag = 'input window, operand 6, single buffered']
    #allocation11 [shape = 'u8[196608]{0}', space=vmem, size = 0x30000, scoped, tag = 'input window, operand 7, single buffered']
    #allocation12 [shape = 's32[1]{0}', space=sflag, size = 0x4, scoped, tag = 'scoped memory for r_actor_forward.1']
    #allocation13 [shape = 'u8[65536]{0}', space=vmem, size = 0x10000, scoped, tag = 'input window, operand 8, single buffered']
    #allocation14 [shape = 'u8[4096]{0}', space=vmem, size = 0x1000, scoped, tag = 'output window, operand 1, single buffered']
    %16 = vsyncpa [#allocation3], 0
    %17 = vsyncpa [#allocation6], 0
    %18 = vsyncpa [#allocation9], 0
    %19 = vsyncpa [#allocation12], 0
    %20 = vsyncpa [#allocation4], 0
    // Predicated region
    $region2: #{r_actor_forward.1} parent=1 // pred_check
      _
    $region3: #{r_actor_forward.1} parent=1 // pred_check_branch
      %22 = sbr.rel (0) target = $region5
    $region4: #{r_actor_forward.1} parent=1 // pred_region
      %s24 = ssub.s32 128, 128
      %25 = vsyncadd [#allocation3], %s24
      %s27 = sshll.u32 [#allocation2], 4
      %s28 = int_to_ptr.vmem [resolvable:$true] %s27
      %30 = dma.hbm_to_vmem [thread:$0]  %s0, 128, %s28, [#allocation3]
    $region5: #{r_actor_forward.1} parent=1 // pred_fallthru
      _
    // Predicated region
    $region6: #{r_actor_forward.1} parent=1 // pred_check
      _
    $region7: #{r_actor_forward.1} parent=1 // pred_check_branch
      %32 = sbr.rel (0) target = $region9
    $region8: #{r_actor_forward.1} parent=1 // pred_region
      _
    $region9: #{r_actor_forward.1} parent=1 // pred_fallthru
      _
    // Predicated region
    $region10: #{r_actor_forward.1} parent=1 // pred_check
      _
    $region11: #{r_actor_forward.1} parent=1 // pred_check_branch
      %34 = sbr.rel (0) target = $region13
    $region12: #{r_actor_forward.1} parent=1 // pred_region
      %s36 = ssub.s32 128, 128
      %37 = vsyncadd [#allocation6], %s36
      %s39 = sshll.u32 [#allocation5], 4
      %s40 = int_to_ptr.vmem [resolvable:$true] %s39
      %42 = dma.hbm_to_vmem [thread:$0]  %s2, 128, %s40, [#allocation6]
    $region13: #{r_actor_forward.1} parent=1 // pred_fallthru
      _
    // Predicated region
    $region14: #{r_actor_forward.1} parent=1 // pred_check
      _
    $region15: #{r_actor_forward.1} parent=1 // pred_check_branch
      %44 = sbr.rel (0) target = $region17
    $region16: #{r_actor_forward.1} parent=1 // pred_region
      _
    $region17: #{r_actor_forward.1} parent=1 // pred_fallthru
      _
    // Predicated region
    $region18: #{r_actor_forward.1} parent=1 // pred_check
      _
    $region19: #{r_actor_forward.1} parent=1 // pred_check_branch
      %46 = sbr.rel (0) target = $region21
    $region20: #{r_actor_forward.1} parent=1 // pred_region
      %s48 = ssub.s32 768, 768
      %49 = vsyncadd [#allocation6], %s48
      %s50 = sshll.u32 [#allocation7], 4
      %s51 = int_to_ptr.vmem [resolvable:$true] %s50
      %56 = dma.hbm_to_vmem [thread:$0]  %s4, 768, %s51, [#allocation6], 128, 128, 8
    $region21: #{r_actor_forward.1} parent=1 // pred_fallthru
      _
    // Predicated region
    $region22: #{r_actor_forward.1} parent=1 // pred_check
      _
    $region23: #{r_actor_forward.1} parent=1 // pred_check_branch
      %58 = sbr.rel (0) target = $region25
    $region24: #{r_actor_forward.1} parent=1 // pred_region
      %s60 = ssub.s32 2048, 2048
      %61 = vsyncadd [#allocation9], %s60
      %s62 = sshll.u32 [#allocation8], 4
      %s63 = int_to_ptr.vmem [resolvable:$true] %s62
      %68 = dma.hbm_to_vmem [thread:$0]  %s5, 2048, %s63, [#allocation9], 128, 128, 8
    $region25: #{r_actor_forward.1} parent=1 // pred_fallthru
      _
    // Predicated region
    $region26: #{r_actor_forward.1} parent=1 // pred_check
      _
    $region27: #{r_actor_forward.1} parent=1 // pred_check_branch
      %70 = sbr.rel (0) target = $region29
    $region28: #{r_actor_forward.1} parent=1 // pred_region
      %s72 = ssub.s32 6144, 6144
      %73 = vsyncadd [#allocation9], %s72
      %s74 = sshll.u32 [#allocation10], 4
      %s75 = int_to_ptr.vmem [resolvable:$true] %s74
      %80 = dma.hbm_to_vmem [thread:$0]  %s6, 6144, %s75, [#allocation9], 384, 384, 24
    $region29: #{r_actor_forward.1} parent=1 // pred_fallthru
      _
    // Predicated region
    $region30: #{r_actor_forward.1} parent=1 // pred_check
      _
    $region31: #{r_actor_forward.1} parent=1 // pred_check_branch
      %82 = sbr.rel (0) target = $region33
    $region32: #{r_actor_forward.1} parent=1 // pred_region
      %s84 = ssub.s32 6144, 6144
      %85 = vsyncadd [#allocation12], %s84
      %s86 = sshll.u32 [#allocation11], 4
      %s87 = int_to_ptr.vmem [resolvable:$true] %s86
      %92 = dma.hbm_to_vmem [thread:$0]  %s7, 6144, %s87, [#allocation12], 384, 384, 24
    $region33: #{r_actor_forward.1} parent=1 // pred_fallthru
      _
    // Predicated region
    $region34: #{r_actor_forward.1} parent=1 // pred_check
      _
    $region35: #{r_actor_forward.1} parent=1 // pred_check_branch
      %94 = sbr.rel (0) target = $region37
    $region36: #{r_actor_forward.1} parent=1 // pred_region
      %s96 = ssub.s32 2048, 2048
      %97 = vsyncadd [#allocation12], %s96
      %s98 = sshll.u32 [#allocation13], 4
      %s99 = int_to_ptr.vmem [resolvable:$true] %s98
      %104 = dma.hbm_to_vmem [thread:$0]  %s8, 2048, %s99, [#allocation12], 128, 128, 8
    $region37: #{r_actor_forward.1} parent=1 // pred_fallthru
      _
    // Predicated region
    $region38: #{r_actor_forward.1} parent=1 // pred_check
      _
    $region39: #{r_actor_forward.1} parent=1 // pred_check_branch
      %106 = sbr.rel (0) target = $region41
    $region40: #{r_actor_forward.1} parent=1 // pred_region
      %107 = dma.done [#allocation3], 128
    $region41: #{r_actor_forward.1} parent=1 // pred_fallthru
      _
    // Predicated region
    $region42: #{r_actor_forward.1} parent=1 // pred_check
      _
    $region43: #{r_actor_forward.1} parent=1 // pred_check_branch
      %109 = sbr.rel (0) target = $region45
    $region44: #{r_actor_forward.1} parent=1 // pred_region
      %110 = dma.done [#allocation6], 128
    $region45: #{r_actor_forward.1} parent=1 // pred_fallthru
      _
    // Predicated region
    $region46: #{r_actor_forward.1} parent=1 // pred_check
      _
    $region47: #{r_actor_forward.1} parent=1 // pred_check_branch
      %112 = sbr.rel (0) target = $region49
    $region48: #{r_actor_forward.1} parent=1 // pred_region
      %113 = dma.done [#allocation6], 768
    $region49: #{r_actor_forward.1} parent=1 // pred_fallthru
      _
    // Predicated region
    $region50: #{r_actor_forward.1} parent=1 // pred_check
      _
    $region51: #{r_actor_forward.1} parent=1 // pred_check_branch
      %115 = sbr.rel (0) target = $region53
    $region52: #{r_actor_forward.1} parent=1 // pred_region
      %116 = dma.done [#allocation9], 2048
    $region53: #{r_actor_forward.1} parent=1 // pred_fallthru
      _
    // Predicated region
    $region54: #{r_actor_forward.1} parent=1 // pred_check
      _
    $region55: #{r_actor_forward.1} parent=1 // pred_check_branch
      %118 = sbr.rel (0) target = $region57
    $region56: #{r_actor_forward.1} parent=1 // pred_region
      %119 = dma.done [#allocation9], 6144
    $region57: #{r_actor_forward.1} parent=1 // pred_fallthru
      _
    // Predicated region
    $region58: #{r_actor_forward.1} parent=1 // pred_check
      _
    $region59: #{r_actor_forward.1} parent=1 // pred_check_branch
      %121 = sbr.rel (0) target = $region61
    $region60: #{r_actor_forward.1} parent=1 // pred_region
      %122 = dma.done [#allocation12], 6144
    $region61: #{r_actor_forward.1} parent=1 // pred_fallthru
      _
    // Predicated region
    $region62: #{r_actor_forward.1} parent=1 // pred_check
      _
    $region63: #{r_actor_forward.1} parent=1 // pred_check_branch
      %124 = sbr.rel (0) target = $region65
    $region64: #{r_actor_forward.1} parent=1 // pred_region
      %125 = dma.done [#allocation12], 2048
    $region65: #{r_actor_forward.1} parent=1 // pred_fallthru
      _
    %v126 = vld [vmem:[#allocation2] sm:$0xff]
    %v127 = vld [vmem:[%s1] sm:$0xff]
    %v128 = vld [vmem:[#allocation5] sm:$0xff]
    %vm129 = vcmask 392192
    %v130 = vsel %vm129, %v126, 0.0
    %131 = vadd.xlane.f32.xlu0 %v130
    %v132 = vpop.xlane.xlu0 %131
    %v133 = vrcp.pop 48.0
    %v134 = vmul.f32 %v132, %v133
    %v135 = vsub.f32 %v126, %v134
    %v136 = vmul.f32 %v135, %v135
    %v137 = vsel %vm129, %v136, 0.0
    %138 = vadd.xlane.f32.xlu0 %v137
    %v139 = vpop.xlane.xlu0 %138
    %v140 = vmul.f32 %v139, %v133
    %v141 = vadd.f32 %v140, 1e-05
    %v142 = vrsqrt.pop %v141
    %v143 = vmul.f32 %v135, %v142
    %v144 = vld [vmem:[#allocation7] sm:$0xff]
    %v145 = vld [vmem:[#allocation7 + $0x8] sm:$0xff]
    %v146 = vld [vmem:[#allocation7 + $0x10] sm:$0xff]
    %v147 = vld [vmem:[#allocation7 + $0x18] sm:$0xff]
    %v148 = vld [vmem:[#allocation7 + $0x20] sm:$0xff]
    %v149 = vld [vmem:[#allocation7 + $0x28] sm:$0xff]
    %v150 = vld [vmem:[%s3] ss:$0 sm:$0xff]
    %v152 = vsel %vm129, %v143, 0
    %154 = vmatprep.subr.mxu0 0.0
    %155 = vmatpush1.msra.mxu0 %v144
    %156 = vmatprep.subr.mxu0 0.0
    %157 = vmatpush1.msra.mxu0 %v145
    %158 = vmatprep.subr.mxu0 0.0
    %159 = vmatpush1.msra.mxu0 %v146
    %160 = vmatprep.subr.mxu0 0.0
    %161 = vmatpush1.msra.mxu0 %v147
    %162 = vmatprep.subr.mxu0 0.0
    %163 = vmatpush1.msra.mxu0 %v148
    %164 = vmatprep.subr.mxu0 0.0
    %165 = vmatpush1.msra.mxu0 %v149
    %166 = vmatprep.subr.mxu0 0.0
    %167 = vmatpush1.msra.mxu0 0.0
    %168 = vmatprep.subr.mxu0 0.0
    %169 = vmatpush1.msra.mxu0 0.0
    %170 = vmatprep.subr.mxu0 0.0
    %171 = vmatpush1.msra.mxu0 0.0
    %172 = vmatprep.subr.mxu0 0.0
    %173 = vmatpush1.msra.mxu0 0.0
    %174 = vmatprep.subr.mxu0 0.0
    %175 = vmatpush1.msra.mxu0 0.0
    %176 = vmatprep.subr.mxu0 0.0
    %177 = vmatpush1.msra.mxu0 0.0
    %178 = vmatprep.subr.mxu0 0.0
    %179 = vmatpush1.msra.mxu0 0.0
    %180 = vmatprep.subr.mxu0 0.0
    %181 = vmatpush1.msra.mxu0 0.0
    %182 = vmatprep.subr.mxu0 0.0
    %183 = vmatpush1.msra.mxu0 0.0
    %184 = vmatprep.subr.mxu0 0.0
    %185 = vmatpush1.msra.mxu0 0.0
    %186 = vmatprep.subr.mxu0 0.0
    %187 = vmatpush1.msra.mxu0 0.0
    %188 = vmatprep.subr.mxu0 0.0
    %189 = vmatpush1.msra.mxu0 0.0
    %190 = vmatprep.subr.mxu0 0.0
    %191 = vmatpush1.msra.mxu0 0.0
    %192 = vmatprep.subr.mxu0 0.0
    %193 = vmatpush1.msra.mxu0 0.0
    %194 = vmatprep.subr.mxu0 0.0
    %195 = vmatpush1.msra.mxu0 0.0
    %196 = vmatprep.subr.mxu0 0.0
    %197 = vmatpush1.msra.mxu0 0.0
    %198 = vmatprep.subr.mxu0 0.0
    %199 = vmatpush1.msra.mxu0 0.0
    %200 = vmatprep.subr.mxu0 0.0
    %201 = vmatpush1.msra.mxu0 0.0
    %202 = vmatprep.subr.mxu0 0.0
    %203 = vmatpush1.msra.mxu0 0.0
    %204 = vmatprep.subr.mxu0 0.0
    %205 = vmatpush1.msra.mxu0 0.0
    %206 = vmatprep.subr.mxu0 0.0
    %207 = vmatpush1.msra.mxu0 0.0
    %208 = vmatprep.subr.mxu0 0.0
    %209 = vmatpush1.msra.mxu0 0.0
    %210 = vmatprep.subr.mxu0 0.0
    %211 = vmatpush1.msra.mxu0 0.0
    %212 = vmatprep.subr.mxu0 0.0
    %213 = vmatpush1.msra.mxu0 0.0
    %214 = vmatprep.subr.mxu0 0.0
    %215 = vmatpush1.msra.mxu0 0.0
    %216 = vmatprep.subr.mxu0 0.0
    %217 = vmatpush1.msra.mxu0 0.0
    %218 = vmatprep.mubr.f32.mxu0 0.0
    %219 = vmatmul.mubr.f32.gmra.mrb[0].mxu0 %v152
    %v220 = vpop.f32.mrb[0].mxu0
    %v221 = vadd.f32 %v150, %v220
    %v222 = vpop.f32.mrb[0].mxu0
    %223 = vdwg.mxu0
    %v224 = vmax.f32 %v221, 0.0
    %v225 = vlaneseq
    %v226 = vand.u32 %v225, 127
    %vm227 = vcmp.lt.s32.totalorder %v226, 64
    %vm228 = vcmask 523264
    %v229 = vsel %vm228, %v224, 0.0
    %230 = vadd.xlane.f32.xlu0 %v229
    %v231 = vpop.xlane.xlu0 %230
    %v232 = vrcp.pop 64.0
    %v233 = vmul.f32 %v231, %v232
    %235 = vrot.lane.b32.xlu0 %v224, 64
    %v236 = vpop.permute.xlu0 %235
    %v238 = vsel %vm228, %v236, 0.0
    %239 = vadd.xlane.f32.xlu0 %v238
    %v240 = vpop.xlane.xlu0 %239
    %v241 = vmul.f32 %v240, %v232
    %v242 = vsel %vm227, %v233, %v241
    %v243 = vsub.f32 %v224, %v242
    %v244 = vmul.f32 %v243, %v243
    %v245 = vsel %vm228, %v244, 0.0
    %246 = vadd.xlane.f32.xlu0 %v245
    %v247 = vpop.xlane.xlu0 %246
    %v248 = vmul.f32 %v247, %v232
    %250 = vrot.lane.b32.xlu0 %v244, 64
    %v251 = vpop.permute.xlu0 %250
    %v253 = vsel %vm228, %v251, 0.0
    %254 = vadd.xlane.f32.xlu0 %v253
    %v255 = vpop.xlane.xlu0 %254
    %v256 = vmul.f32 %v255, %v232
    %v257 = vsel %vm227, %v248, %v256
    %v258 = vadd.f32 %v257, 1e-05
    %v259 = vrsqrt.pop %v258
    %v260 = vmul.f32 %v243, %v259
    %v261 = vld [vmem:[#allocation8] sm:$0xff]
    %v262 = vld [vmem:[#allocation8 + $0x8] sm:$0xff]
    %v263 = vld [vmem:[#allocation8 + $0x10] sm:$0xff]
    %v264 = vld [vmem:[#allocation8 + $0x18] sm:$0xff]
    %v265 = vld [vmem:[#allocation8 + $0x20] sm:$0xff]
    %v266 = vld [vmem:[#allocation8 + $0x28] sm:$0xff]
    %v267 = vld [vmem:[#allocation8 + $0x30] sm:$0xff]
    %v268 = vld [vmem:[#allocation8 + $0x38] sm:$0xff]
    %v269 = vld [vmem:[#allocation8 + $0x40] sm:$0xff]
    %v270 = vld [vmem:[#allocation8 + $0x48] sm:$0xff]
    %v271 = vld [vmem:[#allocation8 + $0x50] sm:$0xff]
    %v272 = vld [vmem:[#allocation8 + $0x58] sm:$0xff]
    %v273 = vld [vmem:[#allocation8 + $0x60] sm:$0xff]
    %v274 = vld [vmem:[#allocation8 + $0x68] sm:$0xff]
    %v275 = vld [vmem:[#allocation8 + $0x70] sm:$0xff]
    %v276 = vld [vmem:[#allocation8 + $0x78] sm:$0xff]
    %v277 = vld [vmem:[%s3 + $0x1] ss:$0 sm:$0xff]
    %278 = vmatprep.subr.mxu0 0.0
    %279 = vmatpush1.msra.mxu0 %v261
    %280 = vmatprep.subr.mxu0 0.0
    %281 = vmatpush1.msra.mxu0 %v262
    %282 = vmatprep.subr.mxu0 0.0
    %283 = vmatpush1.msra.mxu0 %v263
    %284 = vmatprep.subr.mxu0 0.0
    %285 = vmatpush1.msra.mxu0 %v264
    %286 = vmatprep.subr.mxu0 0.0
    %287 = vmatpush1.msra.mxu0 %v265
    %288 = vmatprep.subr.mxu0 0.0
    %289 = vmatpush1.msra.mxu0 %v266
    %290 = vmatprep.subr.mxu0 0.0
    %291 = vmatpush1.msra.mxu0 %v267
    %292 = vmatprep.subr.mxu0 0.0
    %293 = vmatpush1.msra.mxu0 %v268
    %294 = vmatprep.subr.mxu0 0.0
    %295 = vmatpush1.msra.mxu0 %v269
    %296 = vmatprep.subr.mxu0 0.0
    %297 = vmatpush1.msra.mxu0 %v270
    %298 = vmatprep.subr.mxu0 0.0
    %299 = vmatpush1.msra.mxu0 %v271
    %300 = vmatprep.subr.mxu0 0.0
    %301 = vmatpush1.msra.mxu0 %v272
    %302 = vmatprep.subr.mxu0 0.0
    %303 = vmatpush1.msra.mxu0 %v273
    %304 = vmatprep.subr.mxu0 0.0
    %305 = vmatpush1.msra.mxu0 %v274
    %306 = vmatprep.subr.mxu0 0.0
    %307 = vmatpush1.msra.mxu0 %v275
    %308 = vmatprep.subr.mxu0 0.0
    %309 = vmatpush1.msra.mxu0 %v276
    %310 = vmatprep.subr.mxu0 0.0
    %311 = vmatpush1.msra.mxu0 0.0
    %312 = vmatprep.subr.mxu0 0.0
    %313 = vmatpush1.msra.mxu0 0.0
    %314 = vmatprep.subr.mxu0 0.0
    %315 = vmatpush1.msra.mxu0 0.0
    %316 = vmatprep.subr.mxu0 0.0
    %317 = vmatpush1.msra.mxu0 0.0
    %318 = vmatprep.subr.mxu0 0.0
    %319 = vmatpush1.msra.mxu0 0.0
    %320 = vmatprep.subr.mxu0 0.0
    %321 = vmatpush1.msra.mxu0 0.0
    %322 = vmatprep.subr.mxu0 0.0
    %323 = vmatpush1.msra.mxu0 0.0
    %324 = vmatprep.subr.mxu0 0.0
    %325 = vmatpush1.msra.mxu0 0.0
    %326 = vmatprep.subr.mxu0 0.0
    %327 = vmatpush1.msra.mxu0 0.0
    %328 = vmatprep.subr.mxu0 0.0
    %329 = vmatpush1.msra.mxu0 0.0
    %330 = vmatprep.subr.mxu0 0.0
    %331 = vmatpush1.msra.mxu0 0.0
    %332 = vmatprep.subr.mxu0 0.0
    %333 = vmatpush1.msra.mxu0 0.0
    %334 = vmatprep.subr.mxu0 0.0
    %335 = vmatpush1.msra.mxu0 0.0
    %336 = vmatprep.subr.mxu0 0.0
    %337 = vmatpush1.msra.mxu0 0.0
    %338 = vmatprep.subr.mxu0 0.0
    %339 = vmatpush1.msra.mxu0 0.0
    %340 = vmatprep.subr.mxu0 0.0
    %341 = vmatpush1.msra.mxu0 0.0
    %342 = vmatprep.mubr.f32.mxu0 0.0
    %343 = vmatmul.mubr.f32.gmra.mrb[0].mxu0 %v260
    %v344 = vpop.f32.mrb[0].mxu0
    %v345 = vadd.f32 %v277, %v344
    %v346 = vpop.f32.mrb[0].mxu0
    %347 = vdwg.mxu0
    %v348 = vmax.f32 %v345, 0.0
    %v349 = vsel %vm228, %v348, 0.0
    %350 = vadd.xlane.f32.xlu0 %v349
    %v351 = vpop.xlane.xlu0 %350
    %v352 = vmul.f32 %v351, %v232
    %354 = vrot.lane.b32.xlu0 %v348, 64
    %v355 = vpop.permute.xlu0 %354
    %v357 = vsel %vm228, %v355, 0.0
    %358 = vadd.xlane.f32.xlu0 %v357
    %v359 = vpop.xlane.xlu0 %358
    %v360 = vmul.f32 %v359, %v232
    %v361 = vsel %vm227, %v352, %v360
    %v362 = vsub.f32 %v348, %v361
    %v363 = vmul.f32 %v362, %v362
    %v364 = vsel %vm228, %v363, 0.0
    %365 = vadd.xlane.f32.xlu0 %v364
    %v366 = vpop.xlane.xlu0 %365
    %v367 = vmul.f32 %v366, %v232
    %369 = vrot.lane.b32.xlu0 %v363, 64
    %v370 = vpop.permute.xlu0 %369
    %v372 = vsel %vm228, %v370, 0.0
    %373 = vadd.xlane.f32.xlu0 %v372
    %v374 = vpop.xlane.xlu0 %373
    %v375 = vmul.f32 %v374, %v232
    %v376 = vsel %vm227, %v367, %v375
    %v377 = vadd.f32 %v376, 1e-05
    %v378 = vrsqrt.pop %v377
    %v379 = vmul.f32 %v362, %v378
    %381 = vset.pattern.permute.xlu0 0
    %382 = vperm.xlu0 %381, %v127
    %v383 = vpop.permute.xlu0 %382
    %v385 = vmul.f32 %v128, %v383
    %v386 = vld [vmem:[#allocation10] sm:$0xff]
    %v387 = vld [vmem:[#allocation10 + $0x8] sm:$0xff]
    %v388 = vld [vmem:[#allocation10 + $0x10] sm:$0xff]
    %v389 = vld [vmem:[#allocation10 + $0x18] sm:$0xff]
    %v390 = vld [vmem:[#allocation10 + $0x20] sm:$0xff]
    %v391 = vld [vmem:[#allocation10 + $0x28] sm:$0xff]
    %v392 = vld [vmem:[#allocation10 + $0x30] sm:$0xff]
    %v393 = vld [vmem:[#allocation10 + $0x38] sm:$0xff]
    %v394 = vld [vmem:[#allocation10 + $0x40] sm:$0xff]
    %v395 = vld [vmem:[#allocation10 + $0x48] sm:$0xff]
    %v396 = vld [vmem:[#allocation10 + $0x50] sm:$0xff]
    %v397 = vld [vmem:[#allocation10 + $0x58] sm:$0xff]
    %v398 = vld [vmem:[#allocation10 + $0x60] sm:$0xff]
    %v399 = vld [vmem:[#allocation10 + $0x68] sm:$0xff]
    %v400 = vld [vmem:[#allocation10 + $0x70] sm:$0xff]
    %v401 = vld [vmem:[#allocation10 + $0x78] sm:$0xff]
    %v402 = vld [vmem:[#allocation10 + $0x80] sm:$0xff]
    %v403 = vld [vmem:[#allocation10 + $0x88] sm:$0xff]
    %v404 = vld [vmem:[#allocation10 + $0x90] sm:$0xff]
    %v405 = vld [vmem:[#allocation10 + $0x98] sm:$0xff]
    %v406 = vld [vmem:[#allocation10 + $0xa0] sm:$0xff]
    %v407 = vld [vmem:[#allocation10 + $0xa8] sm:$0xff]
    %v408 = vld [vmem:[#allocation10 + $0xb0] sm:$0xff]
    %v409 = vld [vmem:[#allocation10 + $0xb8] sm:$0xff]
    %v410 = vld [vmem:[#allocation10 + $0xc0] sm:$0xff]
    %v411 = vld [vmem:[#allocation10 + $0xc8] sm:$0xff]
    %v412 = vld [vmem:[#allocation10 + $0xd0] sm:$0xff]
    %v413 = vld [vmem:[#allocation10 + $0xd8] sm:$0xff]
    %v414 = vld [vmem:[#allocation10 + $0xe0] sm:$0xff]
    %v415 = vld [vmem:[#allocation10 + $0xe8] sm:$0xff]
    %v416 = vld [vmem:[#allocation10 + $0xf0] sm:$0xff]
    %v417 = vld [vmem:[#allocation10 + $0xf8] sm:$0xff]
    %v418 = vld [vmem:[#allocation10 + $0x100] sm:$0xff]
    %v419 = vld [vmem:[#allocation10 + $0x108] sm:$0xff]
    %v420 = vld [vmem:[#allocation10 + $0x110] sm:$0xff]
    %v421 = vld [vmem:[#allocation10 + $0x118] sm:$0xff]
    %v422 = vld [vmem:[#allocation10 + $0x120] sm:$0xff]
    %v423 = vld [vmem:[#allocation10 + $0x128] sm:$0xff]
    %v424 = vld [vmem:[#allocation10 + $0x130] sm:$0xff]
    %v425 = vld [vmem:[#allocation10 + $0x138] sm:$0xff]
    %v426 = vld [vmem:[#allocation10 + $0x140] sm:$0xff]
    %v427 = vld [vmem:[#allocation10 + $0x148] sm:$0xff]
    %v428 = vld [vmem:[#allocation10 + $0x150] sm:$0xff]
    %v429 = vld [vmem:[#allocation10 + $0x158] sm:$0xff]
    %v430 = vld [vmem:[#allocation10 + $0x160] sm:$0xff]
    %v431 = vld [vmem:[#allocation10 + $0x168] sm:$0xff]
    %v432 = vld [vmem:[#allocation10 + $0x170] sm:$0xff]
    %v433 = vld [vmem:[#allocation10 + $0x178] sm:$0xff]
    %s434 = scalar_lea.vmem %s3, 2
    %v435 = vld [vmem:[%s434] ss:$8 sm:$0x7]
    %v437 = vlaneseq
    %v438 = vshrl.u32 %v437, 7
    %v439 = vsub.s32 0, %v438
    %v440 = vrot.slane %v435, %v439
    %v441 = vlaneseq
    %v442 = vshrl.u32 %v441, 7
    %v443 = vsub.s32 1, %v442
    %v444 = vrot.slane %v435, %v443
    %v445 = vlaneseq
    %v446 = vshrl.u32 %v445, 7
    %v447 = vsub.s32 2, %v446
    %v448 = vrot.slane %v435, %v447
    %452 = vmatprep.subr.mxu0 %v387
    %453 = vmatpush1.msra.mxu0 %v386
    %454 = vmatprep.subr.mxu0 %v390
    %455 = vmatpush1.msra.mxu0 %v389
    %456 = vmatprep.subr.mxu0 %v393
    %457 = vmatpush1.msra.mxu0 %v392
    %458 = vmatprep.subr.mxu0 %v396
    %459 = vmatpush1.msra.mxu0 %v395
    %460 = vmatprep.subr.mxu0 %v399
    %461 = vmatpush1.msra.mxu0 %v398
    %462 = vmatprep.subr.mxu0 %v402
    %463 = vmatpush1.msra.mxu0 %v401
    %464 = vmatprep.subr.mxu0 %v405
    %465 = vmatpush1.msra.mxu0 %v404
    %466 = vmatprep.subr.mxu0 %v408
    %467 = vmatpush1.msra.mxu0 %v407
    %468 = vmatprep.subr.mxu0 %v411
    %469 = vmatpush1.msra.mxu0 %v410
    %470 = vmatprep.subr.mxu0 %v414
    %471 = vmatpush1.msra.mxu0 %v413
    %472 = vmatprep.subr.mxu0 %v417
    %473 = vmatpush1.msra.mxu0 %v416
    %474 = vmatprep.subr.mxu0 %v420
    %475 = vmatpush1.msra.mxu0 %v419
    %476 = vmatprep.subr.mxu0 %v423
    %477 = vmatpush1.msra.mxu0 %v422
    %478 = vmatprep.subr.mxu0 %v426
    %479 = vmatpush1.msra.mxu0 %v425
    %480 = vmatprep.subr.mxu0 %v429
    %481 = vmatpush1.msra.mxu0 %v428
    %482 = vmatprep.subr.mxu0 %v432
    %483 = vmatpush1.msra.mxu0 %v431
    %484 = vmatprep.subr.mxu0 0.0
    %485 = vmatpush1.msra.mxu0 0.0
    %486 = vmatprep.subr.mxu0 0.0
    %487 = vmatpush1.msra.mxu0 0.0
    %488 = vmatprep.subr.mxu0 0.0
    %489 = vmatpush1.msra.mxu0 0.0
    %490 = vmatprep.subr.mxu0 0.0
    %491 = vmatpush1.msra.mxu0 0.0
    %492 = vmatprep.subr.mxu0 0.0
    %493 = vmatpush1.msra.mxu0 0.0
    %494 = vmatprep.subr.mxu0 0.0
    %495 = vmatpush1.msra.mxu0 0.0
    %496 = vmatprep.subr.mxu0 0.0
    %497 = vmatpush1.msra.mxu0 0.0
    %498 = vmatprep.subr.mxu0 0.0
    %499 = vmatpush1.msra.mxu0 0.0
    %500 = vmatprep.subr.mxu0 0.0
    %501 = vmatpush1.msra.mxu0 0.0
    %502 = vmatprep.subr.mxu0 0.0
    %503 = vmatpush1.msra.mxu0 0.0
    %504 = vmatprep.subr.mxu0 0.0
    %505 = vmatpush1.msra.mxu0 0.0
    %506 = vmatprep.subr.mxu0 0.0
    %507 = vmatpush1.msra.mxu0 0.0
    %508 = vmatprep.subr.mxu0 0.0
    %509 = vmatpush1.msra.mxu0 0.0
    %510 = vmatprep.subr.mxu0 0.0
    %511 = vmatpush1.msra.mxu0 0.0
    %512 = vmatprep.subr.mxu0 0.0
    %513 = vmatpush1.msra.mxu0 0.0
    %514 = vmatprep.subr.mxu0 0.0
    %515 = vmatpush1.msra.mxu0 0.0
    %516 = vmatprep.mubr.f32.mxu0 0.0
    %517 = vmatmul.mubr.f32.gmra.mrb[0].mxu0 %v379
    %v518 = vpop.f32.mrb[0].mxu0
    %v519 = vadd.f32 %v440, %v518
    %v520 = vpop.f32.mrb[0].mxu0
    %v521 = vadd.f32 %v444, %v520
    %522 = vdwg.mxu0
    %523 = vmatprep.subr.mxu0 0.0
    %524 = vmatpush1.msra.mxu0 %v388
    %525 = vmatprep.subr.mxu0 0.0
    %526 = vmatpush1.msra.mxu0 %v391
    %527 = vmatprep.subr.mxu0 0.0
    %528 = vmatpush1.msra.mxu0 %v394
    %529 = vmatprep.subr.mxu0 0.0
    %530 = vmatpush1.msra.mxu0 %v397
    %531 = vmatprep.subr.mxu0 0.0
    %532 = vmatpush1.msra.mxu0 %v400
    %533 = vmatprep.subr.mxu0 0.0
    %534 = vmatpush1.msra.mxu0 %v403
    %535 = vmatprep.subr.mxu0 0.0
    %536 = vmatpush1.msra.mxu0 %v406
    %537 = vmatprep.subr.mxu0 0.0
    %538 = vmatpush1.msra.mxu0 %v409
    %539 = vmatprep.subr.mxu0 0.0
    %540 = vmatpush1.msra.mxu0 %v412
    %541 = vmatprep.subr.mxu0 0.0
    %542 = vmatpush1.msra.mxu0 %v415
    %543 = vmatprep.subr.mxu0 0.0
    %544 = vmatpush1.msra.mxu0 %v418
    %545 = vmatprep.subr.mxu0 0.0
    %546 = vmatpush1.msra.mxu0 %v421
    %547 = vmatprep.subr.mxu0 0.0
    %548 = vmatpush1.msra.mxu0 %v424
    %549 = vmatprep.subr.mxu0 0.0
    %550 = vmatpush1.msra.mxu0 %v427
    %551 = vmatprep.subr.mxu0 0.0
    %552 = vmatpush1.msra.mxu0 %v430
    %553 = vmatprep.subr.mxu0 0.0
    %554 = vmatpush1.msra.mxu0 %v433
    %555 = vmatprep.subr.mxu0 0.0
    %556 = vmatpush1.msra.mxu0 0.0
    %557 = vmatprep.subr.mxu0 0.0
    %558 = vmatpush1.msra.mxu0 0.0
    %559 = vmatprep.subr.mxu0 0.0
    %560 = vmatpush1.msra.mxu0 0.0
    %561 = vmatprep.subr.mxu0 0.0
    %562 = vmatpush1.msra.mxu0 0.0
    %563 = vmatprep.subr.mxu0 0.0
    %564 = vmatpush1.msra.mxu0 0.0
    %565 = vmatprep.subr.mxu0 0.0
    %566 = vmatpush1.msra.mxu0 0.0
    %567 = vmatprep.subr.mxu0 0.0
    %568 = vmatpush1.msra.mxu0 0.0
    %569 = vmatprep.subr.mxu0 0.0
    %570 = vmatpush1.msra.mxu0 0.0
    %571 = vmatprep.subr.mxu0 0.0
    %572 = vmatpush1.msra.mxu0 0.0
    %573 = vmatprep.subr.mxu0 0.0
    %574 = vmatpush1.msra.mxu0 0.0
    %575 = vmatprep.subr.mxu0 0.0
    %576 = vmatpush1.msra.mxu0 0.0
    %577 = vmatprep.subr.mxu0 0.0
    %578 = vmatpush1.msra.mxu0 0.0
    %579 = vmatprep.subr.mxu0 0.0
    %580 = vmatpush1.msra.mxu0 0.0
    %581 = vmatprep.subr.mxu0 0.0
    %582 = vmatpush1.msra.mxu0 0.0
    %583 = vmatprep.subr.mxu0 0.0
    %584 = vmatpush1.msra.mxu0 0.0
    %585 = vmatprep.subr.mxu0 0.0
    %586 = vmatpush1.msra.mxu0 0.0
    %587 = vmatprep.mubr.f32.mxu0 0.0
    %588 = vmatmul.mubr.f32.gmra.mrb[0].mxu0 %v379
    %v589 = vpop.f32.mrb[0].mxu0
    %v590 = vadd.f32 %v448, %v589
    %v591 = vpop.f32.mrb[0].mxu0
    %592 = vdwg.mxu0
    %v593 = vld [vmem:[#allocation11] sm:$0xff]
    %v594 = vld [vmem:[#allocation11 + $0x8] sm:$0xff]
    %v595 = vld [vmem:[#allocation11 + $0x10] sm:$0xff]
    %v596 = vld [vmem:[#allocation11 + $0x18] sm:$0xff]
    %v597 = vld [vmem:[#allocation11 + $0x20] sm:$0xff]
    %v598 = vld [vmem:[#allocation11 + $0x28] sm:$0xff]
    %v599 = vld [vmem:[#allocation11 + $0x30] sm:$0xff]
    %v600 = vld [vmem:[#allocation11 + $0x38] sm:$0xff]
    %v601 = vld [vmem:[#allocation11 + $0x40] sm:$0xff]
    %v602 = vld [vmem:[#allocation11 + $0x48] sm:$0xff]
    %v603 = vld [vmem:[#allocation11 + $0x50] sm:$0xff]
    %v604 = vld [vmem:[#allocation11 + $0x58] sm:$0xff]
    %v605 = vld [vmem:[#allocation11 + $0x60] sm:$0xff]
    %v606 = vld [vmem:[#allocation11 + $0x68] sm:$0xff]
    %v607 = vld [vmem:[#allocation11 + $0x70] sm:$0xff]
    %v608 = vld [vmem:[#allocation11 + $0x78] sm:$0xff]
    %v609 = vld [vmem:[#allocation11 + $0x80] sm:$0xff]
    %v610 = vld [vmem:[#allocation11 + $0x88] sm:$0xff]
    %v611 = vld [vmem:[#allocation11 + $0x90] sm:$0xff]
    %v612 = vld [vmem:[#allocation11 + $0x98] sm:$0xff]
    %v613 = vld [vmem:[#allocation11 + $0xa0] sm:$0xff]
    %v614 = vld [vmem:[#allocation11 + $0xa8] sm:$0xff]
    %v615 = vld [vmem:[#allocation11 + $0xb0] sm:$0xff]
    %v616 = vld [vmem:[#allocation11 + $0xb8] sm:$0xff]
    %v617 = vld [vmem:[#allocation11 + $0xc0] sm:$0xff]
    %v618 = vld [vmem:[#allocation11 + $0xc8] sm:$0xff]
    %v619 = vld [vmem:[#allocation11 + $0xd0] sm:$0xff]
    %v620 = vld [vmem:[#allocation11 + $0xd8] sm:$0xff]
    %v621 = vld [vmem:[#allocation11 + $0xe0] sm:$0xff]
    %v622 = vld [vmem:[#allocation11 + $0xe8] sm:$0xff]
    %v623 = vld [vmem:[#allocation11 + $0xf0] sm:$0xff]
    %v624 = vld [vmem:[#allocation11 + $0xf8] sm:$0xff]
    %v625 = vld [vmem:[#allocation11 + $0x100] sm:$0xff]
    %v626 = vld [vmem:[#allocation11 + $0x108] sm:$0xff]
    %v627 = vld [vmem:[#allocation11 + $0x110] sm:$0xff]
    %v628 = vld [vmem:[#allocation11 + $0x118] sm:$0xff]
    %v629 = vld [vmem:[#allocation11 + $0x120] sm:$0xff]
    %v630 = vld [vmem:[#allocation11 + $0x128] sm:$0xff]
    %v631 = vld [vmem:[#allocation11 + $0x130] sm:$0xff]
    %v632 = vld [vmem:[#allocation11 + $0x138] sm:$0xff]
    %v633 = vld [vmem:[#allocation11 + $0x140] sm:$0xff]
    %v634 = vld [vmem:[#allocation11 + $0x148] sm:$0xff]
    %v635 = vld [vmem:[#allocation11 + $0x150] sm:$0xff]
    %v636 = vld [vmem:[#allocation11 + $0x158] sm:$0xff]
    %v637 = vld [vmem:[#allocation11 + $0x160] sm:$0xff]
    %v638 = vld [vmem:[#allocation11 + $0x168] sm:$0xff]
    %v639 = vld [vmem:[#allocation11 + $0x170] sm:$0xff]
    %v640 = vld [vmem:[#allocation11 + $0x178] sm:$0xff]
    %s641 = scalar_lea.vmem %s3, 3
    %v642 = vld [vmem:[%s641] ss:$8 sm:$0x7]
    %v644 = vlaneseq
    %v645 = vshrl.u32 %v644, 7
    %v646 = vsub.s32 0, %v645
    %v647 = vrot.slane %v642, %v646
    %v648 = vlaneseq
    %v649 = vshrl.u32 %v648, 7
    %v650 = vsub.s32 1, %v649
    %v651 = vrot.slane %v642, %v650
    %v652 = vlaneseq
    %v653 = vshrl.u32 %v652, 7
    %v654 = vsub.s32 2, %v653
    %v655 = vrot.slane %v642, %v654
    %659 = vmatprep.subr.mxu0 %v594
    %660 = vmatpush1.msra.mxu0 %v593
    %661 = vmatprep.subr.mxu0 %v597
    %662 = vmatpush1.msra.mxu0 %v596
    %663 = vmatprep.subr.mxu0 %v600
    %664 = vmatpush1.msra.mxu0 %v599
    %665 = vmatprep.subr.mxu0 %v603
    %666 = vmatpush1.msra.mxu0 %v602
    %667 = vmatprep.subr.mxu0 %v606
    %668 = vmatpush1.msra.mxu0 %v605
    %669 = vmatprep.subr.mxu0 %v609
    %670 = vmatpush1.msra.mxu0 %v608
    %671 = vmatprep.subr.mxu0 %v612
    %672 = vmatpush1.msra.mxu0 %v611
    %673 = vmatprep.subr.mxu0 %v615
    %674 = vmatpush1.msra.mxu0 %v614
    %675 = vmatprep.subr.mxu0 %v618
    %676 = vmatpush1.msra.mxu0 %v617
    %677 = vmatprep.subr.mxu0 %v621
    %678 = vmatpush1.msra.mxu0 %v620
    %679 = vmatprep.subr.mxu0 %v624
    %680 = vmatpush1.msra.mxu0 %v623
    %681 = vmatprep.subr.mxu0 %v627
    %682 = vmatpush1.msra.mxu0 %v626
    %683 = vmatprep.subr.mxu0 %v630
    %684 = vmatpush1.msra.mxu0 %v629
    %685 = vmatprep.subr.mxu0 %v633
    %686 = vmatpush1.msra.mxu0 %v632
    %687 = vmatprep.subr.mxu0 %v636
    %688 = vmatpush1.msra.mxu0 %v635
    %689 = vmatprep.subr.mxu0 %v639
    %690 = vmatpush1.msra.mxu0 %v638
    %691 = vmatprep.subr.mxu0 0.0
    %692 = vmatpush1.msra.mxu0 0.0
    %693 = vmatprep.subr.mxu0 0.0
    %694 = vmatpush1.msra.mxu0 0.0
    %695 = vmatprep.subr.mxu0 0.0
    %696 = vmatpush1.msra.mxu0 0.0
    %697 = vmatprep.subr.mxu0 0.0
    %698 = vmatpush1.msra.mxu0 0.0
    %699 = vmatprep.subr.mxu0 0.0
    %700 = vmatpush1.msra.mxu0 0.0
    %701 = vmatprep.subr.mxu0 0.0
    %702 = vmatpush1.msra.mxu0 0.0
    %703 = vmatprep.subr.mxu0 0.0
    %704 = vmatpush1.msra.mxu0 0.0
    %705 = vmatprep.subr.mxu0 0.0
    %706 = vmatpush1.msra.mxu0 0.0
    %707 = vmatprep.subr.mxu0 0.0
    %708 = vmatpush1.msra.mxu0 0.0
    %709 = vmatprep.subr.mxu0 0.0
    %710 = vmatpush1.msra.mxu0 0.0
    %711 = vmatprep.subr.mxu0 0.0
    %712 = vmatpush1.msra.mxu0 0.0
    %713 = vmatprep.subr.mxu0 0.0
    %714 = vmatpush1.msra.mxu0 0.0
    %715 = vmatprep.subr.mxu0 0.0
    %716 = vmatpush1.msra.mxu0 0.0
    %717 = vmatprep.subr.mxu0 0.0
    %718 = vmatpush1.msra.mxu0 0.0
    %719 = vmatprep.subr.mxu0 0.0
    %720 = vmatpush1.msra.mxu0 0.0
    %721 = vmatprep.subr.mxu0 0.0
    %722 = vmatpush1.msra.mxu0 0.0
    %723 = vmatprep.mubr.f32.mxu0 0.0
    %724 = vmatmul.mubr.f32.gmra.mrb[0].mxu0 %v385
    %v725 = vpop.f32.mrb[0].mxu0
    %v726 = vadd.f32 %v647, %v725
    %v727 = vpop.f32.mrb[0].mxu0
    %v728 = vadd.f32 %v651, %v727
    %729 = vdwg.mxu0
    %730 = vmatprep.subr.mxu0 0.0
    %731 = vmatpush1.msra.mxu0 %v595
    %732 = vmatprep.subr.mxu0 0.0
    %733 = vmatpush1.msra.mxu0 %v598
    %734 = vmatprep.subr.mxu0 0.0
    %735 = vmatpush1.msra.mxu0 %v601
    %736 = vmatprep.subr.mxu0 0.0
    %737 = vmatpush1.msra.mxu0 %v604
    %738 = vmatprep.subr.mxu0 0.0
    %739 = vmatpush1.msra.mxu0 %v607
    %740 = vmatprep.subr.mxu0 0.0
    %741 = vmatpush1.msra.mxu0 %v610
    %742 = vmatprep.subr.mxu0 0.0
    %743 = vmatpush1.msra.mxu0 %v613
    %744 = vmatprep.subr.mxu0 0.0
    %745 = vmatpush1.msra.mxu0 %v616
    %746 = vmatprep.subr.mxu0 0.0
    %747 = vmatpush1.msra.mxu0 %v619
    %748 = vmatprep.subr.mxu0 0.0
    %749 = vmatpush1.msra.mxu0 %v622
    %750 = vmatprep.subr.mxu0 0.0
    %751 = vmatpush1.msra.mxu0 %v625
    %752 = vmatprep.subr.mxu0 0.0
    %753 = vmatpush1.msra.mxu0 %v628
    %754 = vmatprep.subr.mxu0 0.0
    %755 = vmatpush1.msra.mxu0 %v631
    %756 = vmatprep.subr.mxu0 0.0
    %757 = vmatpush1.msra.mxu0 %v634
    %758 = vmatprep.subr.mxu0 0.0
    %759 = vmatpush1.msra.mxu0 %v637
    %760 = vmatprep.subr.mxu0 0.0
    %761 = vmatpush1.msra.mxu0 %v640
    %762 = vmatprep.subr.mxu0 0.0
    %763 = vmatpush1.msra.mxu0 0.0
    %764 = vmatprep.subr.mxu0 0.0
    %765 = vmatpush1.msra.mxu0 0.0
    %766 = vmatprep.subr.mxu0 0.0
    %767 = vmatpush1.msra.mxu0 0.0
    %768 = vmatprep.subr.mxu0 0.0
    %769 = vmatpush1.msra.mxu0 0.0
    %770 = vmatprep.subr.mxu0 0.0
    %771 = vmatpush1.msra.mxu0 0.0
    %772 = vmatprep.subr.mxu0 0.0
    %773 = vmatpush1.msra.mxu0 0.0
    %774 = vmatprep.subr.mxu0 0.0
    %775 = vmatpush1.msra.mxu0 0.0
    %776 = vmatprep.subr.mxu0 0.0
    %777 = vmatpush1.msra.mxu0 0.0
    %778 = vmatprep.subr.mxu0 0.0
    %779 = vmatpush1.msra.mxu0 0.0
    %780 = vmatprep.subr.mxu0 0.0
    %781 = vmatpush1.msra.mxu0 0.0
    %782 = vmatprep.subr.mxu0 0.0
    %783 = vmatpush1.msra.mxu0 0.0
    %784 = vmatprep.subr.mxu0 0.0
    %785 = vmatpush1.msra.mxu0 0.0
    %786 = vmatprep.subr.mxu0 0.0
    %787 = vmatpush1.msra.mxu0 0.0
    %788 = vmatprep.subr.mxu0 0.0
    %789 = vmatpush1.msra.mxu0 0.0
    %790 = vmatprep.subr.mxu0 0.0
    %791 = vmatpush1.msra.mxu0 0.0
    %792 = vmatprep.subr.mxu0 0.0
    %793 = vmatpush1.msra.mxu0 0.0
    %794 = vmatprep.mubr.f32.mxu0 0.0
    %795 = vmatmul.mubr.f32.gmra.mrb[0].mxu0 %v385
    %v796 = vpop.f32.mrb[0].mxu0
    %v797 = vadd.f32 %v655, %v796
    %v798 = vpop.f32.mrb[0].mxu0
    %799 = vdwg.mxu0
    %v800 = vadd.f32 %v519, %v726
    %v801 = vadd.f32 %v521, %v728
    %v802 = vxor.u32 %v800, 2147483648
    %v803 = vxor.u32 %v801, 2147483648
    %v804 = vmul.f32 %v802, 1.442695
    %v805 = vpow.pop %v804
    %v806 = vmul.f32 %v803, 1.442695
    %v807 = vpow.pop %v806
    %v808 = vadd.f32 %v805, 1.0
    %v809 = vadd.f32 %v807, 1.0
    %v810 = vrcp.pop %v808
    %v811 = vmul.f32 1.0, %v810
    %v812 = vrcp.pop %v809
    %v813 = vmul.f32 1.0, %v812
    %v814 = vmul.f32 %v811, %v797
    %v815 = vadd.f32 %v590, %v814
    %v816 = vtanh.pop %v815
    %v817 = vsub.f32 1.0, %v813
    %v818 = vmul.f32 %v817, %v816
    %v819 = vmul.f32 %v813, %v385
    %v820 = vadd.f32 %v818, %v819
    %821 = vst [vmem:[#allocation14] sm:$0xff] %v820
    %v822 = vsel %vm228, %v820, 0.0
    %823 = vadd.xlane.f32.xlu0 %v822
    %v824 = vpop.xlane.xlu0 %823
    %v825 = vmul.f32 %v824, %v232
    %827 = vrot.lane.b32.xlu0 %v820, 64
    %v828 = vpop.permute.xlu0 %827
    %v830 = vsel %vm228, %v828, 0.0
    %831 = vadd.xlane.f32.xlu0 %v830
    %v832 = vpop.xlane.xlu0 %831
    %v833 = vmul.f32 %v832, %v232
    %v834 = vsel %vm227, %v825, %v833
    %v835 = vsub.f32 %v820, %v834
    %v836 = vmul.f32 %v835, %v835
    %v837 = vsel %vm228, %v836, 0.0
    %838 = vadd.xlane.f32.xlu0 %v837
    %v839 = vpop.xlane.xlu0 %838
    %v840 = vmul.f32 %v839, %v232
    %842 = vrot.lane.b32.xlu0 %v836, 64
    %v843 = vpop.permute.xlu0 %842
    %v845 = vsel %vm228, %v843, 0.0
    %846 = vadd.xlane.f32.xlu0 %v845
    %v847 = vpop.xlane.xlu0 %846
    %v848 = vmul.f32 %v847, %v232
    %v849 = vsel %vm227, %v840, %v848
    %v850 = vadd.f32 %v849, 1e-05
    %v851 = vrsqrt.pop %v850
    %v852 = vmul.f32 %v835, %v851
    %v853 = vld [vmem:[#allocation13] sm:$0xff]
    %v854 = vld [vmem:[#allocation13 + $0x8] sm:$0xff]
    %v855 = vld [vmem:[#allocation13 + $0x10] sm:$0xff]
    %v856 = vld [vmem:[#allocation13 + $0x18] sm:$0xff]
    %v857 = vld [vmem:[#allocation13 + $0x20] sm:$0xff]
    %v858 = vld [vmem:[#allocation13 + $0x28] sm:$0xff]
    %v859 = vld [vmem:[#allocation13 + $0x30] sm:$0xff]
    %v860 = vld [vmem:[#allocation13 + $0x38] sm:$0xff]
    %v861 = vld [vmem:[#allocation13 + $0x40] sm:$0xff]
    %v862 = vld [vmem:[#allocation13 + $0x48] sm:$0xff]
    %v863 = vld [vmem:[#allocation13 + $0x50] sm:$0xff]
    %v864 = vld [vmem:[#allocation13 + $0x58] sm:$0xff]
    %v865 = vld [vmem:[#allocation13 + $0x60] sm:$0xff]
    %v866 = vld [vmem:[#allocation13 + $0x68] sm:$0xff]
    %v867 = vld [vmem:[#allocation13 + $0x70] sm:$0xff]
    %v868 = vld [vmem:[#allocation13 + $0x78] sm:$0xff]
    %v869 = vld [vmem:[%s3 + $0x4] ss:$0 sm:$0xff]
    %870 = vmatprep.subr.mxu0 0.0
    %871 = vmatpush1.msra.mxu0 %v853
    %872 = vmatprep.subr.mxu0 0.0
    %873 = vmatpush1.msra.mxu0 %v854
    %874 = vmatprep.subr.mxu0 0.0
    %875 = vmatpush1.msra.mxu0 %v855
    %876 = vmatprep.subr.mxu0 0.0
    %877 = vmatpush1.msra.mxu0 %v856
    %878 = vmatprep.subr.mxu0 0.0
    %879 = vmatpush1.msra.mxu0 %v857
    %880 = vmatprep.subr.mxu0 0.0
    %881 = vmatpush1.msra.mxu0 %v858
    %882 = vmatprep.subr.mxu0 0.0
    %883 = vmatpush1.msra.mxu0 %v859
    %884 = vmatprep.subr.mxu0 0.0
    %885 = vmatpush1.msra.mxu0 %v860
    %886 = vmatprep.subr.mxu0 0.0
    %887 = vmatpush1.msra.mxu0 %v861
    %888 = vmatprep.subr.mxu0 0.0
    %889 = vmatpush1.msra.mxu0 %v862
    %890 = vmatprep.subr.mxu0 0.0
    %891 = vmatpush1.msra.mxu0 %v863
    %892 = vmatprep.subr.mxu0 0.0
    %893 = vmatpush1.msra.mxu0 %v864
    %894 = vmatprep.subr.mxu0 0.0
    %895 = vmatpush1.msra.mxu0 %v865
    %896 = vmatprep.subr.mxu0 0.0
    %897 = vmatpush1.msra.mxu0 %v866
    %898 = vmatprep.subr.mxu0 0.0
    %899 = vmatpush1.msra.mxu0 %v867
    %900 = vmatprep.subr.mxu0 0.0
    %901 = vmatpush1.msra.mxu0 %v868
    %902 = vmatprep.subr.mxu0 0.0
    %903 = vmatpush1.msra.mxu0 0.0
    %904 = vmatprep.subr.mxu0 0.0
    %905 = vmatpush1.msra.mxu0 0.0
    %906 = vmatprep.subr.mxu0 0.0
    %907 = vmatpush1.msra.mxu0 0.0
    %908 = vmatprep.subr.mxu0 0.0
    %909 = vmatpush1.msra.mxu0 0.0
    %910 = vmatprep.subr.mxu0 0.0
    %911 = vmatpush1.msra.mxu0 0.0
    %912 = vmatprep.subr.mxu0 0.0
    %913 = vmatpush1.msra.mxu0 0.0
    %914 = vmatprep.subr.mxu0 0.0
    %915 = vmatpush1.msra.mxu0 0.0
    %916 = vmatprep.subr.mxu0 0.0
    %917 = vmatpush1.msra.mxu0 0.0
    %918 = vmatprep.subr.mxu0 0.0
    %919 = vmatpush1.msra.mxu0 0.0
    %920 = vmatprep.subr.mxu0 0.0
    %921 = vmatpush1.msra.mxu0 0.0
    %922 = vmatprep.subr.mxu0 0.0
    %923 = vmatpush1.msra.mxu0 0.0
    %924 = vmatprep.subr.mxu0 0.0
    %925 = vmatpush1.msra.mxu0 0.0
    %926 = vmatprep.subr.mxu0 0.0
    %927 = vmatpush1.msra.mxu0 0.0
    %928 = vmatprep.subr.mxu0 0.0
    %929 = vmatpush1.msra.mxu0 0.0
    %930 = vmatprep.subr.mxu0 0.0
    %931 = vmatpush1.msra.mxu0 0.0
    %932 = vmatprep.subr.mxu0 0.0
    %933 = vmatpush1.msra.mxu0 0.0
    %934 = vmatprep.mubr.f32.mxu0 0.0
    %935 = vmatmul.mubr.f32.gmra.mrb[0].mxu0 %v852
    %v936 = vpop.f32.mrb[0].mxu0
    %v937 = vadd.f32 %v869, %v936
    %v938 = vpop.f32.mrb[0].mxu0
    %939 = vdwg.mxu0
    %vm940 = vcmp.lt.s32.totalorder %v226, 5
    %v941 = vsel %vm940, %v937, -1e+30
    %v942 = vsel %vm228, %v941, -inf
    %943 = vmax.xlane.f32.xlu0 %v942
    %v944 = vpop.xlane.xlu0 %943
    %v945 = vsub.f32 %v941, %v944
    %v946 = vmul.f32 %v945, 1.442695
    %v947 = vpow.pop %v946
    %v948 = vsel %vm228, %v947, 0.0
    %949 = vadd.xlane.f32.xlu0 %v948
    %v950 = vpop.xlane.xlu0 %949
    %v951 = vlog2.pop %v950
    %v952 = vmul.f32 %v951, 0.6931472
    %v953 = vadd.f32 %v952, %v944
    %vm954 = vcmp.eq.f32.partialorder %v941, %v944
    %v955 = vsel %vm954, %v226, 64
    %v956 = vsel %vm228, %v955, 2147483647
    %v957 = vand.u32 %v956, 65535
    %v958 = vshra.s32 %v956, 16
    %v959 = vcvt.s32.f32 %v957
    %v960 = vcvt.s32.f32 %v958
    %961 = vmin.xlane.f32.xlu0 %v960
    %v962 = vpop.xlane.xlu0 %961
    %vm963 = vcmp.eq.f32.partialorder %v960, %v962
    %v964 = vsel %vm963, %v959, inf
    %965 = vmin.xlane.f32.xlu0 %v964
    %v966 = vpop.xlane.xlu0 %965
    %v967 = vcvt.f32.s32 %v966
    %v968 = vcvt.f32.s32 %v962
    %v969 = vshll.u32 %v968, 16
    %v970 = vadd.s32 %v969, %v967
    %v971 = vcvt.s32.f32 %v970
    %vm972 = vcmp.eq.s32.totalorder %v226, %v970
    %v973 = vsub.f32 %v941, %v953
    %v974 = vsel %vm972, %v973, 0.0
    %v975 = vsel %vm228, %v974, 0.0
    %976 = vadd.xlane.f32.xlu0 %v975
    %v977 = vpop.xlane.xlu0 %976
    %vm978 = vcmp.lt.s32.totalorder %v226, 3
    %980 = vrot.lane.b32.xlu0 %v937, 64
    %v981 = vpop.permute.xlu0 %980
    %v983 = vsel %vm978, %v981, -1e+30
    %v984 = vsel %vm228, %v983, -inf
    %985 = vmax.xlane.f32.xlu0 %v984
    %v986 = vpop.xlane.xlu0 %985
    %v987 = vsub.f32 %v983, %v986
    %v988 = vmul.f32 %v987, 1.442695
    %v989 = vpow.pop %v988
    %v990 = vsel %vm228, %v989, 0.0
    %991 = vadd.xlane.f32.xlu0 %v990
    %v992 = vpop.xlane.xlu0 %991
    %v993 = vlog2.pop %v992
    %v994 = vmul.f32 %v993, 0.6931472
    %v995 = vadd.f32 %v994, %v986
    %vm996 = vcmp.eq.f32.partialorder %v983, %v986
    %v997 = vsel %vm996, %v226, 64
    %v998 = vsel %vm228, %v997, 2147483647
    %v999 = vand.u32 %v998, 65535
    %v1000 = vshra.s32 %v998, 16
    %v1001 = vcvt.s32.f32 %v999
    %v1002 = vcvt.s32.f32 %v1000
    %1003 = vmin.xlane.f32.xlu0 %v1002
    %v1004 = vpop.xlane.xlu0 %1003
    %vm1005 = vcmp.eq.f32.partialorder %v1002, %v1004
    %v1006 = vsel %vm1005, %v1001, inf
    %1007 = vmin.xlane.f32.xlu0 %v1006
    %v1008 = vpop.xlane.xlu0 %1007
    %v1009 = vcvt.f32.s32 %v1008
    %v1010 = vcvt.f32.s32 %v1004
    %v1011 = vshll.u32 %v1010, 16
    %v1012 = vadd.s32 %v1011, %v1009
    %v1013 = vcvt.s32.f32 %v1012
    %vm1014 = vcmp.eq.s32.totalorder %v226, %v1012
    %v1015 = vsub.f32 %v983, %v995
    %v1016 = vsel %vm1014, %v1015, 0.0
    %v1017 = vsel %vm228, %v1016, 0.0
    %1018 = vadd.xlane.f32.xlu0 %v1017
    %v1019 = vpop.xlane.xlu0 %1018
    %vm1020 = vcmp.eq.s32.totalorder %v226, 0
    %vm1021 = vcmp.eq.s32.totalorder %v226, 1
    %vm1022 = vcmp.eq.s32.totalorder %v226, 2
    %vm1023 = vcmp.eq.s32.totalorder %v226, 3
    %v1024 = vsel %vm1023, %v1019, 0.0
    %v1025 = vsel %vm1022, %v977, %v1024
    %v1026 = vsel %vm1021, %v1013, %v1025
    %v1027 = vsel %vm1020, %v971, %v1026
    %1028 = vst [vmem:[%s9] sm:$0xff] %v1027
    // Predicated region
    $region66: #{r_actor_forward.1} parent=1 // pred_check
      _
    $region67: #{r_actor_forward.1} parent=1 // pred_check_branch
      %1030 = sbr.rel (0) target = $region69
    $region68: #{r_actor_forward.1} parent=1 // pred_region
      _
    $region69: #{r_actor_forward.1} parent=1 // pred_fallthru
      _
    // Predicated region
    $region70: #{r_actor_forward.1} parent=1 // pred_check
      _
    $region71: #{r_actor_forward.1} parent=1 // pred_check_branch
      %1032 = sbr.rel (0) target = $region73
    $region72: #{r_actor_forward.1} parent=1 // pred_region
      %s1034 = ssub.s32 128, 128
      %1035 = vsyncadd [#allocation4], %s1034
      %s1037 = sshll.u32 [#allocation14], 4
      %s1038 = int_to_ptr.vmem [resolvable:$true] %s1037
      %1040 = dma.vmem_to_hbm [thread:$0]  %s1038, 128, %s10, [#allocation4]
    $region73: #{r_actor_forward.1} parent=1 // pred_fallthru
      _
    // Predicated region
    $region74: #{r_actor_forward.1} parent=1 // pred_check
      _
    $region75: #{r_actor_forward.1} parent=1 // pred_check_branch
      %1042 = sbr.rel (0) target = $region77
    $region76: #{r_actor_forward.1} parent=1 // pred_region
      _
    $region77: #{r_actor_forward.1} parent=1 // pred_fallthru
      _
    // Predicated region
    $region78: #{r_actor_forward.1} parent=1 // pred_check
      _
    $region79: #{r_actor_forward.1} parent=1 // pred_check_branch
      %1044 = sbr.rel (0) target = $region81
    $region80: #{r_actor_forward.1} parent=1 // pred_region
      %1045 = dma.done [#allocation4], 128
    $region81: #{r_actor_forward.1} parent=1 // pred_fallthru
      _
    %1046 = vsyncpa [#allocation3], 1
    %1047 = vsyncpa [#allocation6], 1
    %1048 = vsyncpa [#allocation9], 1
    %1049 = vsyncpa [#allocation12], 1
    %1050 = vsyncpa [#allocation4], 1

</llo_original>
